<compile_context>
chip_gen: v5e
topology: v5e:2x2
jax: 0.10.0
libtpu: 0.0.40
codegen_flags: <defaults>
</compile_context>

<pallas_src>
import functools

import jax
import jax.numpy as jnp
from jax.experimental import pallas as pl
from jax.experimental.pallas import tpu as pltpu

LANE = 128
SUBLANE = 8


def _round_up(n, m):
    return ((n + m - 1) // m) * m


def _pad2(a, rows, cols):
    return jnp.pad(a, ((0, rows - a.shape[0]), (0, cols - a.shape[1])))


def _device_kind():
    try:
        return jax.devices()[0].device_kind.lower()
    except Exception:  # pragma: no cover - CPU fallback / interpret mode
        return ""


def _mxu_lane():
    # v5e MXU is 128-wide; v6e/v7x are 256-wide.
    kind = _device_kind()
    return 128 if "v5" in kind else 256


def _lane_round(d, mxu_lane):
    # dims <= 128 (and everything on v5e) pad to the 128-lane vreg width;
    # larger dims pad to the MXU width (256 on v6e/v7x) for full-array tiles.
    if d <= LANE or mxu_lane <= LANE:
        return _round_up(d, LANE)
    return _round_up(d, mxu_lane)


# ---------------------------------------------------------------------------
# Fused kernel: encoder MLP -> residual VQ -> decoder MLP for one batch tile
# ---------------------------------------------------------------------------
def _rqvae_fused_kernel(*refs, n_enc, n_dec, n_levels, tile_n, n_actual):
    p = 0
    x_ref = refs[p]; p += 1
    enc_w = refs[p:p + n_enc]; p += n_enc
    enc_b = refs[p:p + n_enc]; p += n_enc
    dec_w = refs[p:p + n_dec]; p += n_dec
    dec_b = refs[p:p + n_dec]; p += n_dec
    cb_dt_ref = refs[p]; p += 1      # (L, D_pad, K_pad) bf16 (distance matmul)
    cb_hi_ref = refs[p]; p += 1      # (L, K_pad, D_pad) bf16 (hi half of f32 codebook)
    cb_lo_ref = refs[p]; p += 1      # (L, K_pad, D_pad) bf16 (lo residual half)
    e2_ref = refs[p]; p += 1         # (L, 1, K_pad)     f32  (padded K -> huge)
    out_ref = refs[p]; p += 1
    idx_ref = refs[p]; p += 1
    loss_ref = refs[p]; p += 1

    tile = pl.program_id(0)

    # mask for padded batch rows so the loss stays exact under batch padding
    row_ids = tile * tile_n + jax.lax.broadcasted_iota(jnp.int32, (tile_n, 1), 0)
    row_mask = (row_ids < n_actual).astype(jnp.float32)          # (tile_n, 1)

    # ----- encoder MLP: bf16 operands on the MXU, f32 accumulate/elementwise --
    h = x_ref[...]                                               # bf16, fed directly
    for i in range(n_enc):
        lhs = h if h.dtype == jnp.bfloat16 else h.astype(jnp.bfloat16)
        y = jnp.dot(lhs, enc_w[i][...],
                    preferred_element_type=jnp.float32) + enc_b[i][...]
        if i < n_enc - 1:
            y = jnp.maximum(y, 0.0)                              # ReLU (f32, VPU)
        h = y
    x_e = h                                                      # (tile_n, D_pad) f32

    # ----- residual vector quantizer (unrolled over levels, all in VMEM) -----
    k_pad = cb_dt_ref.shape[2]
    idx_lanes = idx_ref.shape[1]
    # hoisted iotas (JAX does not CSE broadcast_in_dim across the unroll)
    lane_iota = jax.lax.broadcasted_iota(jnp.int32, (tile_n, k_pad), 1)
    col_iota = jax.lax.broadcasted_iota(jnp.int32, (tile_n, idx_lanes), 1)

    residual = x_e
    x_q = jnp.zeros_like(x_e)
    sq_sum = jnp.zeros((1, 1), jnp.float32)
    idx_mat = jnp.zeros((tile_n, idx_lanes), jnp.int32)

    for l in range(n_levels):
        e_dt = cb_dt_ref[l]                                      # (D_pad, K_pad) bf16
        e2 = e2_ref[l]                                           # (1, K_pad)     f32

        # argmin_k ||r - e_k||^2  ==  argmin_k (||e_k||^2 - 2 r.e_k)
        xe = jnp.dot(residual.astype(jnp.bfloat16), e_dt,
                     preferred_element_type=jnp.float32)         # (tile_n, K_pad)
        dist = e2 - 2.0 * xe                                     # f32 compare path
        min_d = jnp.min(dist, axis=1, keepdims=True)
        idx = jnp.min(jnp.where(dist == min_d, lane_iota, k_pad),
                      axis=1, keepdims=True)                     # (tile_n, 1) int32

        # gather codewords via one-hot @ codebook: two bf16 matmuls on the
        # fast MXU path (hi/lo split keeps codewords ~f32 accurate)
        onehot = (lane_iota == idx).astype(jnp.bfloat16)
        xq = (jnp.dot(onehot, cb_hi_ref[l], preferred_element_type=jnp.float32)
              + jnp.dot(onehot, cb_lo_ref[l], preferred_element_type=jnp.float32))

        new_res = residual - xq                                  # reused for loss
        masked = new_res * row_mask
        sq_sum = sq_sum + jnp.sum(masked * masked)
        residual = new_res
        x_q = x_q + xq
        idx_mat = jnp.where(col_iota == l, idx, idx_mat)

    # ----- decoder MLP --------------------------------------------------------
    h = x_q
    for i in range(n_dec):
        y = jnp.dot(h.astype(jnp.bfloat16), dec_w[i][...],
                    preferred_element_type=jnp.float32) + dec_b[i][...]
        if i < n_dec - 1:
            y = jnp.maximum(y, 0.0)
        h = y

    out_ref[...] = h.astype(out_ref.dtype)
    idx_ref[...] = idx_mat                                       # lane-dense store
    loss_ref[...] = jnp.broadcast_to(sq_sum.reshape(1, 1, 1), loss_ref.shape)


# ---------------------------------------------------------------------------
# Host-side parameter packing (pad to lane width, pre-transpose codebook)
# ---------------------------------------------------------------------------
def pack_params(params, in_dim, layers, e_dim, mxu_lane=None):
    if mxu_lane is None:
        mxu_lane = _mxu_lane()

    enc_dims = [in_dim] + list(layers) + [e_dim]
    enc_pad = [_lane_round(d, mxu_lane) for d in enc_dims]
    dec_pad = enc_pad[::-1]

    def pack_mlp(ws, bs, dims_pad):
        pw, pb = [], []
        for w, b, din, dout in zip(ws, bs, dims_pad[:-1], dims_pad[1:]):
            pw.append(_pad2(w, din, dout).astype(jnp.bfloat16))
            pb.append(jnp.pad(b, (0, dout - b.shape[0]))
                      .reshape(1, dout).astype(jnp.float32))
        return pw, pb

    enc_w, enc_b = pack_mlp(params["enc_w"], params["enc_b"], enc_pad)
    dec_w, dec_b = pack_mlp(params["dec_w"], params["dec_b"], dec_pad)

    cb = jnp.stack(params["codebooks"])                          # (L, K, D) f32
    n_levels, k, d = cb.shape
    k_pad = _lane_round(k, mxu_lane)
    d_pad = _lane_round(d, mxu_lane)
    cb_f32 = jnp.pad(cb, ((0, 0), (0, k_pad - k), (0, d_pad - d))).astype(jnp.float32)
    # hi/lo bf16 split of the f32 codebook (exact-ish gather, fast MXU path)
    cb_hi = cb_f32.astype(jnp.bfloat16)                          # (L, K_pad, D_pad)
    cb_lo = (cb_f32 - cb_hi.astype(jnp.float32)).astype(jnp.bfloat16)
    cb_dt = jnp.transpose(cb_hi, (0, 2, 1))                      # (L, D_pad, K_pad) bf16
    e2 = jnp.sum(cb_f32 * cb_f32, axis=-1)                       # (L, K_pad)
    valid = (jnp.arange(k_pad) < k)[None, :]
    e2 = jnp.where(valid, e2, jnp.float32(1e30)).reshape(n_levels, 1, k_pad)

    return {
        "enc_w": enc_w, "enc_b": enc_b, "dec_w": dec_w, "dec_b": dec_b,
        "cb_dt": cb_dt, "cb_hi": cb_hi, "cb_lo": cb_lo, "e2": e2,
        "beta": float(params["beta"]),
        "in_dim": in_dim, "e_dim": e_dim,
        "in_pad": enc_pad[0], "n_levels": n_levels,
    }


# ---------------------------------------------------------------------------
# Forward pass wrapper
# ---------------------------------------------------------------------------
def rqvae_forward(x, packed, max_tile_n=512, out_dtype=jnp.float32):
    # out_dtype=jnp.bfloat16 halves the largest HBM writeback if lower-precision
    # reconstructions are acceptable; default keeps the module's f32 output.
    n, in_dim = x.shape
    in_pad = packed["in_pad"]
    n_levels = packed["n_levels"]
    e_dim = packed["e_dim"]
    beta = packed["beta"]

    # batch tile: multiple of the sublane width, capped for VMEM headroom
    tile_n = min(_round_up(n, SUBLANE), max_tile_n)
    n_pad = _round_up(n, tile_n)
    num_tiles = n_pad // tile_n
    # guarantee >=2 grid steps when the batch allows it so v7x's two
    # TensorCores both get work under dimension_semantics=("parallel",)
    if num_tiles < 2 and tile_n > SUBLANE:
        tile_n = max(SUBLANE, _round_up(tile_n // 2, SUBLANE))
        n_pad = _round_up(n, tile_n)
        num_tiles = n_pad // tile_n

    x_p = _pad2(x, n_pad, in_pad).astype(jnp.bfloat16)

    enc_w, enc_b = packed["enc_w"], packed["enc_b"]
    dec_w, dec_b = packed["dec_w"], packed["dec_b"]
    n_enc, n_dec = len(enc_w), len(dec_w)
    idx_lanes = _round_up(max(n_levels, 1), LANE)                # lane-dense indices

    # grid-invariant inputs: constant index_map + single pipeline buffer
    def const2(a):
        return pl.BlockSpec(a.shape, lambda i: (0, 0),
                            pipeline_mode=pl.Buffered(1))

    def const3(a):
        return pl.BlockSpec(a.shape, lambda i: (0, 0, 0),
                            pipeline_mode=pl.Buffered(1))

    const_arrays = (list(enc_w) + list(enc_b) + list(dec_w) + list(dec_b)
                    + [packed["cb_dt"], packed["cb_hi"], packed["cb_lo"],
                       packed["e2"]])

    in_specs = (
        [pl.BlockSpec((tile_n, in_pad), lambda i: (i, 0))]
        + [const2(w) for w in enc_w] + [const2(b) for b in enc_b]
        + [const2(w) for w in dec_w] + [const2(b) for b in dec_b]
        + [const3(packed["cb_dt"]), const3(packed["cb_hi"]),
           const3(packed["cb_lo"]), const3(packed["e2"])]
    )

    out_shape = (
        jax.ShapeDtypeStruct((n_pad, in_pad), out_dtype),             # decoder output
        jax.ShapeDtypeStruct((n_pad, idx_lanes), jnp.int32),          # codeword indices
        jax.ShapeDtypeStruct((num_tiles, SUBLANE, LANE), jnp.float32),  # loss partials
    )
    out_specs = (
        pl.BlockSpec((tile_n, in_pad), lambda i: (i, 0)),
        pl.BlockSpec((tile_n, idx_lanes), lambda i: (i, 0)),
        pl.BlockSpec((1, SUBLANE, LANE), lambda i: (i, 0, 0)),
    )

    # explicit VMEM budget: single-buffered params + double-buffered I/O tiles,
    # ~50% headroom, generation-aware cap (v7x has 64 MiB physical VMEM)
    param_bytes = sum(int(a.size) * a.dtype.itemsize for a in const_arrays)
    io_tile_bytes = 2 * (tile_n * in_pad * 2
                         + tile_n * in_pad * jnp.dtype(out_dtype).itemsize
                         + tile_n * idx_lanes * 4
                         + SUBLANE * LANE * 4)
    cap = (56 << 20) if "v7" in _device_kind() else (100 << 20)
    vmem_limit = int(min(cap, max(32 << 20,
                                  int((param_bytes + io_tile_bytes) * 1.5))))

    kernel = functools.partial(
        _rqvae_fused_kernel,
        n_enc=n_enc, n_dec=n_dec, n_levels=n_levels,
        tile_n=tile_n, n_actual=n)

    out_p, idx_p, loss_part = pl.pallas_call(
        kernel,
        out_shape=out_shape,
        grid=(num_tiles,),
        in_specs=in_specs,
        out_specs=out_specs,
        compiler_params=pltpu.CompilerParams(
            dimension_semantics=("parallel",),
            vmem_limit_bytes=vmem_limit),
    )(x_p, *enc_w, *enc_b, *dec_w, *dec_b,
      packed["cb_dt"], packed["cb_hi"], packed["cb_lo"], packed["e2"])

    out = out_p[:n, :in_dim].astype(jnp.float32)
    indices = idx_p[:n, :n_levels]
    # rq_loss = mean over levels of (1+beta)*mse(x_q_l, residual_l) [forward value]
    rq_loss = (1.0 + beta) * jnp.sum(loss_part[:, 0, 0]) / (n_levels * n * e_dim)
    return out, rq_loss, indices


# ---------------------------------------------------------------------------
# Deterministic parameter construction (unpadded, f32 "module weights")
# ---------------------------------------------------------------------------
def make_params(key, in_dim, layers, e_dim, num_levels, codebook_size, beta):
    enc_dims = [in_dim] + list(layers) + [e_dim]
    dec_dims = enc_dims[::-1]

    def make_mlp(key, dims):
        ws, bs = [], []
        for din, dout in zip(dims[:-1], dims[1:]):
            key, kw, kb = jax.random.split(key, 3)
            ws.append(jax.random.normal(kw, (din, dout), jnp.float32) * 0.1)
            bs.append(jax.random.normal(kb, (dout,), jnp.float32) * 0.01)
        return key, ws, bs

    key, enc_w, enc_b = make_mlp(key, enc_dims)
    key, dec_w, dec_b = make_mlp(key, dec_dims)

    codebooks = []
    for _ in range(num_levels):
        key, kc = jax.random.split(key)
        codebooks.append(
            jax.random.normal(kc, (codebook_size, e_dim), jnp.float32) * 0.1)

    return {
        "enc_w": enc_w, "enc_b": enc_b,
        "dec_w": dec_w, "dec_b": dec_b,
        "codebooks": codebooks,
        "beta": beta,
    }


# ---------------------------------------------------------------------------
if __name__ == "__main__":
    # small, deterministic config (mirrors args: layers, e_dim, num_emb_list, beta)
    batch = 8
    in_dim = 32
    layers = [16]
    e_dim = 8
    num_levels = 3
    codebook_size = 32
    beta = 0.25

    key = jax.random.PRNGKey(0)
    key, kx = jax.random.split(key)
    x = jax.random.normal(kx, (batch, in_dim), jnp.float32)

    raw_params = make_params(key, in_dim, layers, e_dim,
                             num_levels, codebook_size, beta)
    packed = pack_params(raw_params, in_dim, layers, e_dim)

    out, rq_loss, indices = rqvae_forward(x, packed)
    jax.block_until_ready((out, rq_loss, indices))

    assert out.shape == (batch, in_dim)
    assert indices.shape == (batch, num_levels)
    assert rq_loss.shape == ()
    print("KERNEL_OK")
</pallas_src>

<mosaic_0001>
module attributes {stable_mosaic.version = 11 : i64} {
  func.func @_rqvae_fused_kernel(%arg0: i32, %arg1: memref<8x128xbf16, #tpu.memory_space<vmem>>, %arg2: memref<128x128xbf16, #tpu.memory_space<vmem>>, %arg3: memref<128x128xbf16, #tpu.memory_space<vmem>>, %arg4: memref<1x128xf32, #tpu.memory_space<vmem>>, %arg5: memref<1x128xf32, #tpu.memory_space<vmem>>, %arg6: memref<128x128xbf16, #tpu.memory_space<vmem>>, %arg7: memref<128x128xbf16, #tpu.memory_space<vmem>>, %arg8: memref<1x128xf32, #tpu.memory_space<vmem>>, %arg9: memref<1x128xf32, #tpu.memory_space<vmem>>, %arg10: memref<3x128x128xbf16, #tpu.memory_space<vmem>>, %arg11: memref<3x128x128xbf16, #tpu.memory_space<vmem>>, %arg12: memref<3x128x128xbf16, #tpu.memory_space<vmem>>, %arg13: memref<3x1x128xf32, #tpu.memory_space<vmem>>, %arg14: memref<8x128xf32, #tpu.memory_space<vmem>>, %arg15: memref<8x128xi32, #tpu.memory_space<vmem>>, %arg16: memref<1x8x128xf32, #tpu.memory_space<vmem>>) attributes {dimension_semantics = [#tpu.dimension_semantics<parallel>], iteration_bounds = array<i64: 1>, scalar_prefetch = 0 : i64, scratch_operands = 0 : i64, tpu.core_type = #tpu.core_type<tc>, window_params = [{transform_indices = @transform_0, window_bounds = array<i64: 8, 128>}, {pipeline_mode = #tpu.pipeline_mode<synchronous>, transform_indices = @transform_1, window_bounds = array<i64: 128, 128>}, {pipeline_mode = #tpu.pipeline_mode<synchronous>, transform_indices = @transform_2, window_bounds = array<i64: 128, 128>}, {pipeline_mode = #tpu.pipeline_mode<synchronous>, transform_indices = @transform_3, window_bounds = array<i64: 1, 128>}, {pipeline_mode = #tpu.pipeline_mode<synchronous>, transform_indices = @transform_4, window_bounds = array<i64: 1, 128>}, {pipeline_mode = #tpu.pipeline_mode<synchronous>, transform_indices = @transform_5, window_bounds = array<i64: 128, 128>}, {pipeline_mode = #tpu.pipeline_mode<synchronous>, transform_indices = @transform_6, window_bounds = array<i64: 128, 128>}, {pipeline_mode = #tpu.pipeline_mode<synchronous>, transform_indices = @transform_7, window_bounds = array<i64: 1, 128>}, {pipeline_mode = #tpu.pipeline_mode<synchronous>, transform_indices = @transform_8, window_bounds = array<i64: 1, 128>}, {pipeline_mode = #tpu.pipeline_mode<synchronous>, transform_indices = @transform_9, window_bounds = array<i64: 3, 128, 128>}, {pipeline_mode = #tpu.pipeline_mode<synchronous>, transform_indices = @transform_10, window_bounds = array<i64: 3, 128, 128>}, {pipeline_mode = #tpu.pipeline_mode<synchronous>, transform_indices = @transform_11, window_bounds = array<i64: 3, 128, 128>}, {pipeline_mode = #tpu.pipeline_mode<synchronous>, transform_indices = @transform_12, window_bounds = array<i64: 3, 1, 128>}, {transform_indices = @transform_13, window_bounds = array<i64: 8, 128>}, {transform_indices = @transform_14, window_bounds = array<i64: 8, 128>}, {transform_indices = @transform_15, window_bounds = array<i64: 1, 8, 128>}]} {
    %c8_i32 = arith.constant 8 : i32
    %0 = arith.muli %arg0, %c8_i32 : i32
    %1 = tpu.iota {dimensions = array<i32: 0>} : vector<8x1xi32>
    %2 = vector.broadcast %0 : i32 to vector<8x1xi32>
    %3 = arith.addi %2, %1 : vector<8x1xi32>
    %c8_i32_0 = arith.constant 8 : i32
    %4 = vector.broadcast %c8_i32_0 : i32 to vector<8x1xi32>
    %5 = arith.cmpi slt, %3, %4 : vector<8x1xi32>
    %6 = arith.extui %5 : vector<8x1xi1> to vector<8x1xi32>
    %7 = arith.sitofp %6 : vector<8x1xi32> to vector<8x1xf32>
    %c0 = arith.constant 0 : index
    %c0_1 = arith.constant 0 : index
    %8 = vector.load %arg1[%c0, %c0_1] : memref<8x128xbf16, #tpu.memory_space<vmem>>, vector<8x128xbf16>
    %c0_2 = arith.constant 0 : index
    %c0_3 = arith.constant 0 : index
    %9 = vector.load %arg2[%c0_2, %c0_3] : memref<128x128xbf16, #tpu.memory_space<vmem>>, vector<128x128xbf16>
    %cst = arith.constant dense<0.000000e+00> : vector<8x128xf32>
    %10 = tpu.matmul %8, %9, %cst {dimension_numbers = #tpu.dot_dimension_numbers<[1], [0], [0], [1], [0, 0, 1, 1], [], []>} : vector<8x128xbf16>, vector<128x128xbf16>, vector<8x128xf32> -> vector<8x128xf32>
    %c0_4 = arith.constant 0 : index
    %c0_5 = arith.constant 0 : index
    %11 = vector.load %arg4[%c0_4, %c0_5] : memref<1x128xf32, #tpu.memory_space<vmem>>, vector<1x128xf32>
    %12 = vector.broadcast %11 : vector<1x128xf32> to vector<8x128xf32>
    %13 = arith.addf %10, %12 : vector<8x128xf32>
    %cst_6 = arith.constant 0.000000e+00 : f32
    %14 = vector.broadcast %cst_6 : f32 to vector<8x128xf32>
    %15 = arith.maximumf %13, %14 : vector<8x128xf32>
    %16 = arith.truncf %15 : vector<8x128xf32> to vector<8x128xbf16>
    %c0_7 = arith.constant 0 : index
    %c0_8 = arith.constant 0 : index
    %17 = vector.load %arg3[%c0_7, %c0_8] : memref<128x128xbf16, #tpu.memory_space<vmem>>, vector<128x128xbf16>
    %cst_9 = arith.constant dense<0.000000e+00> : vector<8x128xf32>
    %18 = tpu.matmul %16, %17, %cst_9 {dimension_numbers = #tpu.dot_dimension_numbers<[1], [0], [0], [1], [0, 0, 1, 1], [], []>} : vector<8x128xbf16>, vector<128x128xbf16>, vector<8x128xf32> -> vector<8x128xf32>
    %c0_10 = arith.constant 0 : index
    %c0_11 = arith.constant 0 : index
    %19 = vector.load %arg5[%c0_10, %c0_11] : memref<1x128xf32, #tpu.memory_space<vmem>>, vector<1x128xf32>
    %20 = vector.broadcast %19 : vector<1x128xf32> to vector<8x128xf32>
    %21 = arith.addf %18, %20 : vector<8x128xf32>
    %22 = tpu.iota {dimensions = array<i32: 1>} : vector<8x128xi32>
    %23 = tpu.iota {dimensions = array<i32: 1>} : vector<8x128xi32>
    %cst_12 = arith.constant 0.000000e+00 : f32
    %24 = vector.broadcast %cst_12 : f32 to vector<8x128xf32>
    %cst_13 = arith.constant 0.000000e+00 : f32
    %25 = vector.broadcast %cst_13 : f32 to vector<1x1xf32>
    %c0_i32 = arith.constant 0 : i32
    %26 = vector.broadcast %c0_i32 : i32 to vector<8x128xi32>
    %c0_14 = arith.constant 0 : index
    %c0_15 = arith.constant 0 : index
    %c0_16 = arith.constant 0 : index
    %27 = vector.load %arg10[%c0_14, %c0_15, %c0_16] : memref<3x128x128xbf16, #tpu.memory_space<vmem>>, vector<1x128x128xbf16>
    %28 = vector.shape_cast %27 : vector<1x128x128xbf16> to vector<128x128xbf16>
    %c0_17 = arith.constant 0 : index
    %c0_18 = arith.constant 0 : index
    %c0_19 = arith.constant 0 : index
    %29 = vector.load %arg13[%c0_17, %c0_18, %c0_19] : memref<3x1x128xf32, #tpu.memory_space<vmem>>, vector<1x1x128xf32>
    %30 = vector.shape_cast %29 : vector<1x1x128xf32> to vector<1x128xf32>
    %31 = arith.truncf %21 : vector<8x128xf32> to vector<8x128xbf16>
    %cst_20 = arith.constant dense<0.000000e+00> : vector<8x128xf32>
    %32 = tpu.matmul %31, %28, %cst_20 {dimension_numbers = #tpu.dot_dimension_numbers<[1], [0], [0], [1], [0, 0, 1, 1], [], []>} : vector<8x128xbf16>, vector<128x128xbf16>, vector<8x128xf32> -> vector<8x128xf32>
    %cst_21 = arith.constant 2.000000e+00 : f32
    %33 = vector.broadcast %cst_21 : f32 to vector<8x128xf32>
    %34 = arith.mulf %33, %32 : vector<8x128xf32>
    %35 = vector.broadcast %30 : vector<1x128xf32> to vector<8x128xf32>
    %36 = arith.subf %35, %34 : vector<8x128xf32>
    %cst_22 = arith.constant dense<0x7F800000> : vector<8xf32>
    %37 = vector.multi_reduction <minimumf>, %36, %cst_22 [1] : vector<8x128xf32> to vector<8xf32>
    %38 = vector.shape_cast %37 : vector<8xf32> to vector<8x1xf32>
    %39 = vector.broadcast %38 : vector<8x1xf32> to vector<8x128xf32>
    %40 = arith.cmpf oeq, %36, %39 : vector<8x128xf32>
    %c128_i32 = arith.constant 128 : i32
    %41 = vector.broadcast %c128_i32 : i32 to vector<8x128xi32>
    %42 = arith.select %40, %22, %41 : vector<8x128xi1>, vector<8x128xi32>
    %cst_23 = arith.constant dense<2147483647> : vector<8xi32>
    %43 = vector.multi_reduction <minsi>, %42, %cst_23 [1] : vector<8x128xi32> to vector<8xi32>
    %44 = vector.shape_cast %43 : vector<8xi32> to vector<8x1xi32>
    %45 = vector.broadcast %44 : vector<8x1xi32> to vector<8x128xi32>
    %46 = arith.cmpi eq, %22, %45 : vector<8x128xi32>
    %47 = arith.extui %46 : vector<8x128xi1> to vector<8x128xi32>
    %48 = arith.sitofp %47 : vector<8x128xi32> to vector<8x128xf32>
    %49 = arith.truncf %48 : vector<8x128xf32> to vector<8x128xbf16>
    %c0_24 = arith.constant 0 : index
    %c0_25 = arith.constant 0 : index
    %c0_26 = arith.constant 0 : index
    %50 = vector.load %arg11[%c0_24, %c0_25, %c0_26] : memref<3x128x128xbf16, #tpu.memory_space<vmem>>, vector<1x128x128xbf16>
    %51 = vector.shape_cast %50 : vector<1x128x128xbf16> to vector<128x128xbf16>
    %cst_27 = arith.constant dense<0.000000e+00> : vector<8x128xf32>
    %52 = tpu.matmul %49, %51, %cst_27 {dimension_numbers = #tpu.dot_dimension_numbers<[1], [0], [0], [1], [0, 0, 1, 1], [], []>} : vector<8x128xbf16>, vector<128x128xbf16>, vector<8x128xf32> -> vector<8x128xf32>
    %c0_28 = arith.constant 0 : index
    %c0_29 = arith.constant 0 : index
    %c0_30 = arith.constant 0 : index
    %53 = vector.load %arg12[%c0_28, %c0_29, %c0_30] : memref<3x128x128xbf16, #tpu.memory_space<vmem>>, vector<1x128x128xbf16>
    %54 = vector.shape_cast %53 : vector<1x128x128xbf16> to vector<128x128xbf16>
    %cst_31 = arith.constant dense<0.000000e+00> : vector<8x128xf32>
    %55 = tpu.matmul %49, %54, %cst_31 {dimension_numbers = #tpu.dot_dimension_numbers<[1], [0], [0], [1], [0, 0, 1, 1], [], []>} : vector<8x128xbf16>, vector<128x128xbf16>, vector<8x128xf32> -> vector<8x128xf32>
    %56 = arith.addf %52, %55 : vector<8x128xf32>
    %57 = arith.subf %21, %56 : vector<8x128xf32>
    %58 = vector.broadcast %7 : vector<8x1xf32> to vector<8x128xf32>
    %59 = arith.mulf %57, %58 : vector<8x128xf32>
    %60 = arith.mulf %59, %59 : vector<8x128xf32>
    %61 = vector.shape_cast %60 : vector<8x128xf32> to vector<1x8x128xf32>
    %cst_32 = arith.constant dense<0.000000e+00> : vector<1xf32>
    %62 = vector.multi_reduction <add>, %61, %cst_32 [1, 2] : vector<1x8x128xf32> to vector<1xf32>
    %63 = vector.shape_cast %62 : vector<1xf32> to vector<1x1x1xf32>
    %64 = vector.extract %63[0, 0, 0] : f32 from vector<1x1x1xf32>
    %65 = vector.broadcast %64 : f32 to vector<1x1xf32>
    %66 = arith.addf %25, %65 : vector<1x1xf32>
    %67 = arith.addf %24, %56 : vector<8x128xf32>
    %c0_i32_33 = arith.constant 0 : i32
    %68 = vector.broadcast %c0_i32_33 : i32 to vector<8x128xi32>
    %69 = arith.cmpi eq, %23, %68 : vector<8x128xi32>
    %70 = vector.shape_cast %44 : vector<8x1xi32> to vector<8x1xi32>
    %71 = vector.broadcast %70 : vector<8x1xi32> to vector<8x128xi32>
    %72 = arith.select %69, %71, %26 : vector<8x128xi1>, vector<8x128xi32>
    %c1 = arith.constant 1 : index
    %c0_34 = arith.constant 0 : index
    %c0_35 = arith.constant 0 : index
    %73 = vector.load %arg10[%c1, %c0_34, %c0_35] : memref<3x128x128xbf16, #tpu.memory_space<vmem>>, vector<1x128x128xbf16>
    %74 = vector.shape_cast %73 : vector<1x128x128xbf16> to vector<128x128xbf16>
    %c1_36 = arith.constant 1 : index
    %c0_37 = arith.constant 0 : index
    %c0_38 = arith.constant 0 : index
    %75 = vector.load %arg13[%c1_36, %c0_37, %c0_38] : memref<3x1x128xf32, #tpu.memory_space<vmem>>, vector<1x1x128xf32>
    %76 = vector.shape_cast %75 : vector<1x1x128xf32> to vector<1x128xf32>
    %77 = arith.truncf %57 : vector<8x128xf32> to vector<8x128xbf16>
    %cst_39 = arith.constant dense<0.000000e+00> : vector<8x128xf32>
    %78 = tpu.matmul %77, %74, %cst_39 {dimension_numbers = #tpu.dot_dimension_numbers<[1], [0], [0], [1], [0, 0, 1, 1], [], []>} : vector<8x128xbf16>, vector<128x128xbf16>, vector<8x128xf32> -> vector<8x128xf32>
    %cst_40 = arith.constant 2.000000e+00 : f32
    %79 = vector.broadcast %cst_40 : f32 to vector<8x128xf32>
    %80 = arith.mulf %79, %78 : vector<8x128xf32>
    %81 = vector.broadcast %76 : vector<1x128xf32> to vector<8x128xf32>
    %82 = arith.subf %81, %80 : vector<8x128xf32>
    %cst_41 = arith.constant dense<0x7F800000> : vector<8xf32>
    %83 = vector.multi_reduction <minimumf>, %82, %cst_41 [1] : vector<8x128xf32> to vector<8xf32>
    %84 = vector.shape_cast %83 : vector<8xf32> to vector<8x1xf32>
    %85 = vector.broadcast %84 : vector<8x1xf32> to vector<8x128xf32>
    %86 = arith.cmpf oeq, %82, %85 : vector<8x128xf32>
    %c128_i32_42 = arith.constant 128 : i32
    %87 = vector.broadcast %c128_i32_42 : i32 to vector<8x128xi32>
    %88 = arith.select %86, %22, %87 : vector<8x128xi1>, vector<8x128xi32>
    %cst_43 = arith.constant dense<2147483647> : vector<8xi32>
    %89 = vector.multi_reduction <minsi>, %88, %cst_43 [1] : vector<8x128xi32> to vector<8xi32>
    %90 = vector.shape_cast %89 : vector<8xi32> to vector<8x1xi32>
    %91 = vector.broadcast %90 : vector<8x1xi32> to vector<8x128xi32>
    %92 = arith.cmpi eq, %22, %91 : vector<8x128xi32>
    %93 = arith.extui %92 : vector<8x128xi1> to vector<8x128xi32>
    %94 = arith.sitofp %93 : vector<8x128xi32> to vector<8x128xf32>
    %95 = arith.truncf %94 : vector<8x128xf32> to vector<8x128xbf16>
    %c1_44 = arith.constant 1 : index
    %c0_45 = arith.constant 0 : index
    %c0_46 = arith.constant 0 : index
    %96 = vector.load %arg11[%c1_44, %c0_45, %c0_46] : memref<3x128x128xbf16, #tpu.memory_space<vmem>>, vector<1x128x128xbf16>
    %97 = vector.shape_cast %96 : vector<1x128x128xbf16> to vector<128x128xbf16>
    %cst_47 = arith.constant dense<0.000000e+00> : vector<8x128xf32>
    %98 = tpu.matmul %95, %97, %cst_47 {dimension_numbers = #tpu.dot_dimension_numbers<[1], [0], [0], [1], [0, 0, 1, 1], [], []>} : vector<8x128xbf16>, vector<128x128xbf16>, vector<8x128xf32> -> vector<8x128xf32>
    %c1_48 = arith.constant 1 : index
    %c0_49 = arith.constant 0 : index
    %c0_50 = arith.constant 0 : index
    %99 = vector.load %arg12[%c1_48, %c0_49, %c0_50] : memref<3x128x128xbf16, #tpu.memory_space<vmem>>, vector<1x128x128xbf16>
    %100 = vector.shape_cast %99 : vector<1x128x128xbf16> to vector<128x128xbf16>
    %cst_51 = arith.constant dense<0.000000e+00> : vector<8x128xf32>
    %101 = tpu.matmul %95, %100, %cst_51 {dimension_numbers = #tpu.dot_dimension_numbers<[1], [0], [0], [1], [0, 0, 1, 1], [], []>} : vector<8x128xbf16>, vector<128x128xbf16>, vector<8x128xf32> -> vector<8x128xf32>
    %102 = arith.addf %98, %101 : vector<8x128xf32>
    %103 = arith.subf %57, %102 : vector<8x128xf32>
    %104 = vector.broadcast %7 : vector<8x1xf32> to vector<8x128xf32>
    %105 = arith.mulf %103, %104 : vector<8x128xf32>
    %106 = arith.mulf %105, %105 : vector<8x128xf32>
    %107 = vector.shape_cast %106 : vector<8x128xf32> to vector<1x8x128xf32>
    %cst_52 = arith.constant dense<0.000000e+00> : vector<1xf32>
    %108 = vector.multi_reduction <add>, %107, %cst_52 [1, 2] : vector<1x8x128xf32> to vector<1xf32>
    %109 = vector.shape_cast %108 : vector<1xf32> to vector<1x1x1xf32>
    %110 = vector.extract %109[0, 0, 0] : f32 from vector<1x1x1xf32>
    %111 = vector.broadcast %110 : f32 to vector<1x1xf32>
    %112 = arith.addf %66, %111 : vector<1x1xf32>
    %113 = arith.addf %67, %102 : vector<8x128xf32>
    %c1_i32 = arith.constant 1 : i32
    %114 = vector.broadcast %c1_i32 : i32 to vector<8x128xi32>
    %115 = arith.cmpi eq, %23, %114 : vector<8x128xi32>
    %116 = vector.shape_cast %90 : vector<8x1xi32> to vector<8x1xi32>
    %117 = vector.broadcast %116 : vector<8x1xi32> to vector<8x128xi32>
    %118 = arith.select %115, %117, %72 : vector<8x128xi1>, vector<8x128xi32>
    %c2 = arith.constant 2 : index
    %c0_53 = arith.constant 0 : index
    %c0_54 = arith.constant 0 : index
    %119 = vector.load %arg10[%c2, %c0_53, %c0_54] : memref<3x128x128xbf16, #tpu.memory_space<vmem>>, vector<1x128x128xbf16>
    %120 = vector.shape_cast %119 : vector<1x128x128xbf16> to vector<128x128xbf16>
    %c2_55 = arith.constant 2 : index
    %c0_56 = arith.constant 0 : index
    %c0_57 = arith.constant 0 : index
    %121 = vector.load %arg13[%c2_55, %c0_56, %c0_57] : memref<3x1x128xf32, #tpu.memory_space<vmem>>, vector<1x1x128xf32>
    %122 = vector.shape_cast %121 : vector<1x1x128xf32> to vector<1x128xf32>
    %123 = arith.truncf %103 : vector<8x128xf32> to vector<8x128xbf16>
    %cst_58 = arith.constant dense<0.000000e+00> : vector<8x128xf32>
    %124 = tpu.matmul %123, %120, %cst_58 {dimension_numbers = #tpu.dot_dimension_numbers<[1], [0], [0], [1], [0, 0, 1, 1], [], []>} : vector<8x128xbf16>, vector<128x128xbf16>, vector<8x128xf32> -> vector<8x128xf32>
    %cst_59 = arith.constant 2.000000e+00 : f32
    %125 = vector.broadcast %cst_59 : f32 to vector<8x128xf32>
    %126 = arith.mulf %125, %124 : vector<8x128xf32>
    %127 = vector.broadcast %122 : vector<1x128xf32> to vector<8x128xf32>
    %128 = arith.subf %127, %126 : vector<8x128xf32>
    %cst_60 = arith.constant dense<0x7F800000> : vector<8xf32>
    %129 = vector.multi_reduction <minimumf>, %128, %cst_60 [1] : vector<8x128xf32> to vector<8xf32>
    %130 = vector.shape_cast %129 : vector<8xf32> to vector<8x1xf32>
    %131 = vector.broadcast %130 : vector<8x1xf32> to vector<8x128xf32>
    %132 = arith.cmpf oeq, %128, %131 : vector<8x128xf32>
    %c128_i32_61 = arith.constant 128 : i32
    %133 = vector.broadcast %c128_i32_61 : i32 to vector<8x128xi32>
    %134 = arith.select %132, %22, %133 : vector<8x128xi1>, vector<8x128xi32>
    %cst_62 = arith.constant dense<2147483647> : vector<8xi32>
    %135 = vector.multi_reduction <minsi>, %134, %cst_62 [1] : vector<8x128xi32> to vector<8xi32>
    %136 = vector.shape_cast %135 : vector<8xi32> to vector<8x1xi32>
    %137 = vector.broadcast %136 : vector<8x1xi32> to vector<8x128xi32>
    %138 = arith.cmpi eq, %22, %137 : vector<8x128xi32>
    %139 = arith.extui %138 : vector<8x128xi1> to vector<8x128xi32>
    %140 = arith.sitofp %139 : vector<8x128xi32> to vector<8x128xf32>
    %141 = arith.truncf %140 : vector<8x128xf32> to vector<8x128xbf16>
    %c2_63 = arith.constant 2 : index
    %c0_64 = arith.constant 0 : index
    %c0_65 = arith.constant 0 : index
    %142 = vector.load %arg11[%c2_63, %c0_64, %c0_65] : memref<3x128x128xbf16, #tpu.memory_space<vmem>>, vector<1x128x128xbf16>
    %143 = vector.shape_cast %142 : vector<1x128x128xbf16> to vector<128x128xbf16>
    %cst_66 = arith.constant dense<0.000000e+00> : vector<8x128xf32>
    %144 = tpu.matmul %141, %143, %cst_66 {dimension_numbers = #tpu.dot_dimension_numbers<[1], [0], [0], [1], [0, 0, 1, 1], [], []>} : vector<8x128xbf16>, vector<128x128xbf16>, vector<8x128xf32> -> vector<8x128xf32>
    %c2_67 = arith.constant 2 : index
    %c0_68 = arith.constant 0 : index
    %c0_69 = arith.constant 0 : index
    %145 = vector.load %arg12[%c2_67, %c0_68, %c0_69] : memref<3x128x128xbf16, #tpu.memory_space<vmem>>, vector<1x128x128xbf16>
    %146 = vector.shape_cast %145 : vector<1x128x128xbf16> to vector<128x128xbf16>
    %cst_70 = arith.constant dense<0.000000e+00> : vector<8x128xf32>
    %147 = tpu.matmul %141, %146, %cst_70 {dimension_numbers = #tpu.dot_dimension_numbers<[1], [0], [0], [1], [0, 0, 1, 1], [], []>} : vector<8x128xbf16>, vector<128x128xbf16>, vector<8x128xf32> -> vector<8x128xf32>
    %148 = arith.addf %144, %147 : vector<8x128xf32>
    %149 = arith.subf %103, %148 : vector<8x128xf32>
    %150 = vector.broadcast %7 : vector<8x1xf32> to vector<8x128xf32>
    %151 = arith.mulf %149, %150 : vector<8x128xf32>
    %152 = arith.mulf %151, %151 : vector<8x128xf32>
    %153 = vector.shape_cast %152 : vector<8x128xf32> to vector<1x8x128xf32>
    %cst_71 = arith.constant dense<0.000000e+00> : vector<1xf32>
    %154 = vector.multi_reduction <add>, %153, %cst_71 [1, 2] : vector<1x8x128xf32> to vector<1xf32>
    %155 = vector.shape_cast %154 : vector<1xf32> to vector<1x1x1xf32>
    %156 = vector.extract %155[0, 0, 0] : f32 from vector<1x1x1xf32>
    %157 = vector.broadcast %156 : f32 to vector<1x1xf32>
    %158 = arith.addf %112, %157 : vector<1x1xf32>
    %159 = arith.addf %113, %148 : vector<8x128xf32>
    %c2_i32 = arith.constant 2 : i32
    %160 = vector.broadcast %c2_i32 : i32 to vector<8x128xi32>
    %161 = arith.cmpi eq, %23, %160 : vector<8x128xi32>
    %162 = vector.shape_cast %136 : vector<8x1xi32> to vector<8x1xi32>
    %163 = vector.broadcast %162 : vector<8x1xi32> to vector<8x128xi32>
    %164 = arith.select %161, %163, %118 : vector<8x128xi1>, vector<8x128xi32>
    %165 = arith.truncf %159 : vector<8x128xf32> to vector<8x128xbf16>
    %c0_72 = arith.constant 0 : index
    %c0_73 = arith.constant 0 : index
    %166 = vector.load %arg6[%c0_72, %c0_73] : memref<128x128xbf16, #tpu.memory_space<vmem>>, vector<128x128xbf16>
    %cst_74 = arith.constant dense<0.000000e+00> : vector<8x128xf32>
    %167 = tpu.matmul %165, %166, %cst_74 {dimension_numbers = #tpu.dot_dimension_numbers<[1], [0], [0], [1], [0, 0, 1, 1], [], []>} : vector<8x128xbf16>, vector<128x128xbf16>, vector<8x128xf32> -> vector<8x128xf32>
    %c0_75 = arith.constant 0 : index
    %c0_76 = arith.constant 0 : index
    %168 = vector.load %arg8[%c0_75, %c0_76] : memref<1x128xf32, #tpu.memory_space<vmem>>, vector<1x128xf32>
    %169 = vector.broadcast %168 : vector<1x128xf32> to vector<8x128xf32>
    %170 = arith.addf %167, %169 : vector<8x128xf32>
    %cst_77 = arith.constant 0.000000e+00 : f32
    %171 = vector.broadcast %cst_77 : f32 to vector<8x128xf32>
    %172 = arith.maximumf %170, %171 : vector<8x128xf32>
    %173 = arith.truncf %172 : vector<8x128xf32> to vector<8x128xbf16>
    %c0_78 = arith.constant 0 : index
    %c0_79 = arith.constant 0 : index
    %174 = vector.load %arg7[%c0_78, %c0_79] : memref<128x128xbf16, #tpu.memory_space<vmem>>, vector<128x128xbf16>
    %cst_80 = arith.constant dense<0.000000e+00> : vector<8x128xf32>
    %175 = tpu.matmul %173, %174, %cst_80 {dimension_numbers = #tpu.dot_dimension_numbers<[1], [0], [0], [1], [0, 0, 1, 1], [], []>} : vector<8x128xbf16>, vector<128x128xbf16>, vector<8x128xf32> -> vector<8x128xf32>
    %c0_81 = arith.constant 0 : index
    %c0_82 = arith.constant 0 : index
    %176 = vector.load %arg9[%c0_81, %c0_82] : memref<1x128xf32, #tpu.memory_space<vmem>>, vector<1x128xf32>
    %177 = vector.broadcast %176 : vector<1x128xf32> to vector<8x128xf32>
    %178 = arith.addf %175, %177 : vector<8x128xf32>
    %c0_83 = arith.constant 0 : index
    %c0_84 = arith.constant 0 : index
    %179 = vector.load %arg14[%c0_83, %c0_84] : memref<8x128xf32, #tpu.memory_space<vmem>>, vector<8x128xf32>
    tpu.vector_store %arg14[%c0_83, %c0_84], %178 {strides = array<i32>} : memref<8x128xf32, #tpu.memory_space<vmem>>, vector<8x128xf32>,
    %c0_85 = arith.constant 0 : index
    %c0_86 = arith.constant 0 : index
    %180 = vector.load %arg15[%c0_85, %c0_86] : memref<8x128xi32, #tpu.memory_space<vmem>>, vector<8x128xi32>
    tpu.vector_store %arg15[%c0_85, %c0_86], %164 {strides = array<i32>} : memref<8x128xi32, #tpu.memory_space<vmem>>, vector<8x128xi32>,
    %181 = vector.shape_cast %158 : vector<1x1xf32> to vector<1x1x1xf32>
    %182 = vector.shape_cast %181 : vector<1x1x1xf32> to vector<1x1x1xf32>
    %183 = vector.broadcast %182 : vector<1x1x1xf32> to vector<1x8x128xf32>
    %c0_87 = arith.constant 0 : index
    %c0_88 = arith.constant 0 : index
    %c0_89 = arith.constant 0 : index
    %184 = vector.load %arg16[%c0_87, %c0_88, %c0_89] : memref<1x8x128xf32, #tpu.memory_space<vmem>>, vector<1x8x128xf32>
    tpu.vector_store %arg16[%c0_87, %c0_88, %c0_89], %183 {strides = array<i32>} : memref<1x8x128xf32, #tpu.memory_space<vmem>>, vector<1x8x128xf32>,
    return
  }
  func.func @transform_0(%arg0: i32) -> (i32, i32) {
    %c0_i32 = arith.constant 0 : i32
    %c0_i32_0 = arith.constant 0 : i32
    return %arg0, %c0_i32 : i32, i32
  }
  func.func @transform_1(%arg0: i32) -> (i32, i32) {
    %c0_i32 = arith.constant 0 : i32
    %c0_i32_0 = arith.constant 0 : i32
    %c0_i32_1 = arith.constant 0 : i32
    return %c0_i32, %c0_i32_0 : i32, i32
  }
  func.func @transform_2(%arg0: i32) -> (i32, i32) {
    %c0_i32 = arith.constant 0 : i32
    %c0_i32_0 = arith.constant 0 : i32
    %c0_i32_1 = arith.constant 0 : i32
    return %c0_i32, %c0_i32_0 : i32, i32
  }
  func.func @transform_3(%arg0: i32) -> (i32, i32) {
    %c0_i32 = arith.constant 0 : i32
    %c0_i32_0 = arith.constant 0 : i32
    %c0_i32_1 = arith.constant 0 : i32
    return %c0_i32, %c0_i32_0 : i32, i32
  }
  func.func @transform_4(%arg0: i32) -> (i32, i32) {
    %c0_i32 = arith.constant 0 : i32
    %c0_i32_0 = arith.constant 0 : i32
    %c0_i32_1 = arith.constant 0 : i32
    return %c0_i32, %c0_i32_0 : i32, i32
  }
  func.func @transform_5(%arg0: i32) -> (i32, i32) {
    %c0_i32 = arith.constant 0 : i32
    %c0_i32_0 = arith.constant 0 : i32
    %c0_i32_1 = arith.constant 0 : i32
    return %c0_i32, %c0_i32_0 : i32, i32
  }
  func.func @transform_6(%arg0: i32) -> (i32, i32) {
    %c0_i32 = arith.constant 0 : i32
    %c0_i32_0 = arith.constant 0 : i32
    %c0_i32_1 = arith.constant 0 : i32
    return %c0_i32, %c0_i32_0 : i32, i32
  }
  func.func @transform_7(%arg0: i32) -> (i32, i32) {
    %c0_i32 = arith.constant 0 : i32
    %c0_i32_0 = arith.constant 0 : i32
    %c0_i32_1 = arith.constant 0 : i32
    return %c0_i32, %c0_i32_0 : i32, i32
  }
  func.func @transform_8(%arg0: i32) -> (i32, i32) {
    %c0_i32 = arith.constant 0 : i32
    %c0_i32_0 = arith.constant 0 : i32
    %c0_i32_1 = arith.constant 0 : i32
    return %c0_i32, %c0_i32_0 : i32, i32
  }
  func.func @transform_9(%arg0: i32) -> (i32, i32, i32) {
    %c0_i32 = arith.constant 0 : i32
    %c0_i32_0 = arith.constant 0 : i32
    %c0_i32_1 = arith.constant 0 : i32
    %c0_i32_2 = arith.constant 0 : i32
    return %c0_i32, %c0_i32_0, %c0_i32_1 : i32, i32, i32
  }
  func.func @transform_10(%arg0: i32) -> (i32, i32, i32) {
    %c0_i32 = arith.constant 0 : i32
    %c0_i32_0 = arith.constant 0 : i32
    %c0_i32_1 = arith.constant 0 : i32
    %c0_i32_2 = arith.constant 0 : i32
    return %c0_i32, %c0_i32_0, %c0_i32_1 : i32, i32, i32
  }
  func.func @transform_11(%arg0: i32) -> (i32, i32, i32) {
    %c0_i32 = arith.constant 0 : i32
    %c0_i32_0 = arith.constant 0 : i32
    %c0_i32_1 = arith.constant 0 : i32
    %c0_i32_2 = arith.constant 0 : i32
    return %c0_i32, %c0_i32_0, %c0_i32_1 : i32, i32, i32
  }
  func.func @transform_12(%arg0: i32) -> (i32, i32, i32) {
    %c0_i32 = arith.constant 0 : i32
    %c0_i32_0 = arith.constant 0 : i32
    %c0_i32_1 = arith.constant 0 : i32
    %c0_i32_2 = arith.constant 0 : i32
    return %c0_i32, %c0_i32_0, %c0_i32_1 : i32, i32, i32
  }
  func.func @transform_13(%arg0: i32) -> (i32, i32) {
    %c0_i32 = arith.constant 0 : i32
    %c0_i32_0 = arith.constant 0 : i32
    return %arg0, %c0_i32 : i32, i32
  }
  func.func @transform_14(%arg0: i32) -> (i32, i32) {
    %c0_i32 = arith.constant 0 : i32
    %c0_i32_0 = arith.constant 0 : i32
    return %arg0, %c0_i32 : i32, i32
  }
  func.func @transform_15(%arg0: i32) -> (i32, i32, i32) {
    %c0_i32 = arith.constant 0 : i32
    %c0_i32_0 = arith.constant 0 : i32
    %c0_i32_1 = arith.constant 0 : i32
    return %arg0, %c0_i32, %c0_i32_0 : i32, i32, i32
  }
}

</mosaic_0001>

<llo_original>
// kernel: tpu_custom_call.1
$region0: #{tpu_custom_call.1}
  #allocation0 [shape = 'u32[]', space=smem, size = 0x4, offset = 0x4, fixed_abs, tag = 'smem constant byte address 0x4 - core index']
  #allocation1 [shape = 'u32[72,128]{1,0:T(1,128)}', space=vmem, size = 0x9000, scoped, tag = 'internal scratch']
  %s0 = inlined_call_operand.hbm [shape: bf16[8,128], index: 0, kind: input, shape index: {}]
  %s1 = inlined_call_operand.hbm [shape: bf16[128,128], index: 1, kind: input, shape index: {}]
  %s2 = inlined_call_operand.hbm [shape: bf16[128,128], index: 2, kind: input, shape index: {}]
  %s3 = inlined_call_operand.vmem [shape: f32[1,128], index: 3, kind: input, shape index: {}]
  %s4 = inlined_call_operand.vmem [shape: f32[1,128], index: 4, kind: input, shape index: {}]
  %s5 = inlined_call_operand.hbm [shape: bf16[128,128], index: 5, kind: input, shape index: {}]
  %s6 = inlined_call_operand.hbm [shape: bf16[128,128], index: 6, kind: input, shape index: {}]
  %s7 = inlined_call_operand.vmem [shape: f32[1,128], index: 7, kind: input, shape index: {}]
  %s8 = inlined_call_operand.vmem [shape: f32[1,128], index: 8, kind: input, shape index: {}]
  %s9 = inlined_call_operand.hbm [shape: bf16[3,128,128], index: 9, kind: input, shape index: {}]
  %s10 = inlined_call_operand.hbm [shape: bf16[3,128,128], index: 10, kind: input, shape index: {}]
  %s11 = inlined_call_operand.hbm [shape: bf16[3,128,128], index: 11, kind: input, shape index: {}]
  %s12 = inlined_call_operand.vmem [shape: f32[3,1,128], index: 12, kind: input, shape index: {}]
  %s13 = inlined_call_operand.hbm [shape: f32[8,128], index: 13, kind: output, shape index: {0}]
  %s14 = inlined_call_operand.hbm [shape: s32[8,128], index: 14, kind: output, shape index: {1}]
  %s15 = inlined_call_operand.hbm [shape: f32[1,8,128], index: 15, kind: output, shape index: {2}]
  %16 = xla_tuple %s13, %s14, %s15
  %s17 = sld [smem:[#allocation0]]
  $region110: #{tpu_custom_call.1} parent=0
    _
  %s19 = ssub.s32 1, %s17
  %s20 = scalar_select 0, %s19, %s17
  $region1: #{tpu_custom_call.1} parent=0
    #allocation2 [shape = 'u8[2048]{0}', space=vmem, size = 0x800, scoped, tag = 'input window, operand 0, single buffered']
    #allocation3 [shape = 's32[1]{0}', space=sflag, size = 0x4, scoped, tag = 'scoped memory for tpu_custom_call.1']
    #allocation4 [shape = 's32[1]{0}', space=sflag, size = 0x4, scoped, tag = 'scoped memory for tpu_custom_call.1']
    #allocation5 [shape = 'u8[32768]{0}', space=vmem, size = 0x8000, scoped, tag = 'input window, operand 1, single buffered']
    #allocation6 [shape = 's32[1]{0}', space=sflag, size = 0x4, scoped, tag = 'scoped memory for tpu_custom_call.1']
    #allocation7 [shape = 'u8[32768]{0}', space=vmem, size = 0x8000, scoped, tag = 'input window, operand 2, single buffered']
    #allocation8 [shape = 'u8[32768]{0}', space=vmem, size = 0x8000, scoped, tag = 'input window, operand 5, single buffered']
    #allocation9 [shape = 's32[1]{0}', space=sflag, size = 0x4, scoped, tag = 'scoped memory for tpu_custom_call.1']
    #allocation10 [shape = 'u8[32768]{0}', space=vmem, size = 0x8000, scoped, tag = 'input window, operand 6, single buffered']
    #allocation11 [shape = 'u8[98304]{0}', space=vmem, size = 0x18000, scoped, tag = 'input window, operand 9, single buffered']
    #allocation12 [shape = 's32[1]{0}', space=sflag, size = 0x4, scoped, tag = 'scoped memory for tpu_custom_call.1']
    #allocation13 [shape = 'u8[98304]{0}', space=vmem, size = 0x18000, scoped, tag = 'input window, operand 10, single buffered']
    #allocation14 [shape = 'u8[98304]{0}', space=vmem, size = 0x18000, scoped, tag = 'input window, operand 11, single buffered']
    #allocation15 [shape = 's32[1]{0}', space=sflag, size = 0x4, scoped, tag = 'scoped memory for tpu_custom_call.1']
    #allocation16 [shape = 'u8[4096]{0}', space=vmem, size = 0x1000, scoped, tag = 'output window, operand 0, single buffered']
    #allocation17 [shape = 'u8[4096]{0}', space=vmem, size = 0x1000, scoped, tag = 'output window, operand 1, single buffered']
    #allocation18 [shape = 's32[1]{0}', space=sflag, size = 0x4, scoped, tag = 'scoped memory for tpu_custom_call.1']
    #allocation19 [shape = 'u8[4096]{0}', space=vmem, size = 0x1000, scoped, tag = 'output window, operand 2, single buffered']
    %21 = vsyncpa [#allocation3], 0
    %22 = vsyncpa [#allocation6], 0
    %23 = vsyncpa [#allocation9], 0
    %24 = vsyncpa [#allocation12], 0
    %25 = vsyncpa [#allocation15], 0
    %26 = vsyncpa [#allocation4], 0
    %27 = vsyncpa [#allocation18], 0
    // Predicated region
    $region2: #{tpu_custom_call.1} parent=1 // pred_check
      _
    $region3: #{tpu_custom_call.1} parent=1 // pred_check_branch
      %29 = sbr.rel (0) target = $region5
    $region4: #{tpu_custom_call.1} parent=1 // pred_region
      %31 = vsyncadd [#allocation3], 0
      %s33 = sshll.u32 %s0, 4
      %s34 = int_to_ptr.hbm [resolvable:$true] %s33
      %s35 = sshll.u32 [#allocation2], 4
      %s36 = int_to_ptr.vmem [resolvable:$true] %s35
      %38 = dma.hbm_to_vmem [thread:$0]  %s34, 64, %s36, [#allocation3]
    $region5: #{tpu_custom_call.1} parent=1 // pred_fallthru
      _
    // Predicated region
    $region6: #{tpu_custom_call.1} parent=1 // pred_check
      _
    $region7: #{tpu_custom_call.1} parent=1 // pred_check_branch
      %40 = sbr.rel (0) target = $region9
    $region8: #{tpu_custom_call.1} parent=1 // pred_region
      %42 = vsyncadd [#allocation6], 0
      %s43 = sshll.u32 %s1, 4
      %s44 = int_to_ptr.hbm [resolvable:$true] %s43
      %s45 = sshll.u32 [#allocation5], 4
      %s46 = int_to_ptr.vmem [resolvable:$true] %s45
      %51 = dma.hbm_to_vmem [thread:$0]  %s44, 1024, %s46, [#allocation6], 64, 64, 4
    $region9: #{tpu_custom_call.1} parent=1 // pred_fallthru
      _
    // Predicated region
    $region10: #{tpu_custom_call.1} parent=1 // pred_check
      _
    $region11: #{tpu_custom_call.1} parent=1 // pred_check_branch
      %53 = sbr.rel (0) target = $region13
    $region12: #{tpu_custom_call.1} parent=1 // pred_region
      %55 = vsyncadd [#allocation6], 0
      %s56 = sshll.u32 %s2, 4
      %s57 = int_to_ptr.hbm [resolvable:$true] %s56
      %s58 = sshll.u32 [#allocation7], 4
      %s59 = int_to_ptr.vmem [resolvable:$true] %s58
      %64 = dma.hbm_to_vmem [thread:$0]  %s57, 1024, %s59, [#allocation6], 64, 64, 4
    $region13: #{tpu_custom_call.1} parent=1 // pred_fallthru
      _
    // Predicated region
    $region14: #{tpu_custom_call.1} parent=1 // pred_check
      _
    $region15: #{tpu_custom_call.1} parent=1 // pred_check_branch
      %66 = sbr.rel (0) target = $region17
    $region16: #{tpu_custom_call.1} parent=1 // pred_region
      _
    $region17: #{tpu_custom_call.1} parent=1 // pred_fallthru
      _
    // Predicated region
    $region18: #{tpu_custom_call.1} parent=1 // pred_check
      _
    $region19: #{tpu_custom_call.1} parent=1 // pred_check_branch
      %68 = sbr.rel (0) target = $region21
    $region20: #{tpu_custom_call.1} parent=1 // pred_region
      _
    $region21: #{tpu_custom_call.1} parent=1 // pred_fallthru
      _
    // Predicated region
    $region22: #{tpu_custom_call.1} parent=1 // pred_check
      _
    $region23: #{tpu_custom_call.1} parent=1 // pred_check_branch
      %70 = sbr.rel (0) target = $region25
    $region24: #{tpu_custom_call.1} parent=1 // pred_region
      %72 = vsyncadd [#allocation9], 0
      %s73 = sshll.u32 %s5, 4
      %s74 = int_to_ptr.hbm [resolvable:$true] %s73
      %s75 = sshll.u32 [#allocation8], 4
      %s76 = int_to_ptr.vmem [resolvable:$true] %s75
      %81 = dma.hbm_to_vmem [thread:$0]  %s74, 1024, %s76, [#allocation9], 64, 64, 4
    $region25: #{tpu_custom_call.1} parent=1 // pred_fallthru
      _
    // Predicated region
    $region26: #{tpu_custom_call.1} parent=1 // pred_check
      _
    $region27: #{tpu_custom_call.1} parent=1 // pred_check_branch
      %83 = sbr.rel (0) target = $region29
    $region28: #{tpu_custom_call.1} parent=1 // pred_region
      %85 = vsyncadd [#allocation9], 0
      %s86 = sshll.u32 %s6, 4
      %s87 = int_to_ptr.hbm [resolvable:$true] %s86
      %s88 = sshll.u32 [#allocation10], 4
      %s89 = int_to_ptr.vmem [resolvable:$true] %s88
      %94 = dma.hbm_to_vmem [thread:$0]  %s87, 1024, %s89, [#allocation9], 64, 64, 4
    $region29: #{tpu_custom_call.1} parent=1 // pred_fallthru
      _
    // Predicated region
    $region30: #{tpu_custom_call.1} parent=1 // pred_check
      _
    $region31: #{tpu_custom_call.1} parent=1 // pred_check_branch
      %96 = sbr.rel (0) target = $region33
    $region32: #{tpu_custom_call.1} parent=1 // pred_region
      _
    $region33: #{tpu_custom_call.1} parent=1 // pred_fallthru
      _
    // Predicated region
    $region34: #{tpu_custom_call.1} parent=1 // pred_check
      _
    $region35: #{tpu_custom_call.1} parent=1 // pred_check_branch
      %98 = sbr.rel (0) target = $region37
    $region36: #{tpu_custom_call.1} parent=1 // pred_region
      _
    $region37: #{tpu_custom_call.1} parent=1 // pred_fallthru
      _
    // Predicated region
    $region38: #{tpu_custom_call.1} parent=1 // pred_check
      _
    $region39: #{tpu_custom_call.1} parent=1 // pred_check_branch
      %100 = sbr.rel (0) target = $region41
    $region40: #{tpu_custom_call.1} parent=1 // pred_region
      %102 = vsyncadd [#allocation12], 0
      %s103 = sshll.u32 %s9, 4
      %s104 = int_to_ptr.hbm [resolvable:$true] %s103
      %s105 = sshll.u32 [#allocation11], 4
      %s106 = int_to_ptr.vmem [resolvable:$true] %s105
      %111 = dma.hbm_to_vmem [thread:$0]  %s104, 3072, %s106, [#allocation12], 64, 64, 4
    $region41: #{tpu_custom_call.1} parent=1 // pred_fallthru
      _
    // Predicated region
    $region42: #{tpu_custom_call.1} parent=1 // pred_check
      _
    $region43: #{tpu_custom_call.1} parent=1 // pred_check_branch
      %113 = sbr.rel (0) target = $region45
    $region44: #{tpu_custom_call.1} parent=1 // pred_region
      %115 = vsyncadd [#allocation12], 0
      %s116 = sshll.u32 %s10, 4
      %s117 = int_to_ptr.hbm [resolvable:$true] %s116
      %s118 = sshll.u32 [#allocation13], 4
      %s119 = int_to_ptr.vmem [resolvable:$true] %s118
      %124 = dma.hbm_to_vmem [thread:$0]  %s117, 3072, %s119, [#allocation12], 64, 64, 4
    $region45: #{tpu_custom_call.1} parent=1 // pred_fallthru
      _
    // Predicated region
    $region46: #{tpu_custom_call.1} parent=1 // pred_check
      _
    $region47: #{tpu_custom_call.1} parent=1 // pred_check_branch
      %126 = sbr.rel (0) target = $region49
    $region48: #{tpu_custom_call.1} parent=1 // pred_region
      %128 = vsyncadd [#allocation15], 0
      %s129 = sshll.u32 %s11, 4
      %s130 = int_to_ptr.hbm [resolvable:$true] %s129
      %s131 = sshll.u32 [#allocation14], 4
      %s132 = int_to_ptr.vmem [resolvable:$true] %s131
      %137 = dma.hbm_to_vmem [thread:$0]  %s130, 3072, %s132, [#allocation15], 64, 64, 4
    $region49: #{tpu_custom_call.1} parent=1 // pred_fallthru
      _
    // Predicated region
    $region50: #{tpu_custom_call.1} parent=1 // pred_check
      _
    $region51: #{tpu_custom_call.1} parent=1 // pred_check_branch
      %139 = sbr.rel (0) target = $region53
    $region52: #{tpu_custom_call.1} parent=1 // pred_region
      _
    $region53: #{tpu_custom_call.1} parent=1 // pred_fallthru
      _
    // Predicated region
    $region54: #{tpu_custom_call.1} parent=1 // pred_check
      _
    $region55: #{tpu_custom_call.1} parent=1 // pred_check_branch
      %141 = sbr.rel (0) target = $region57
    $region56: #{tpu_custom_call.1} parent=1 // pred_region
      %143 = dma.done [#allocation3], 64
    $region57: #{tpu_custom_call.1} parent=1 // pred_fallthru
      _
    // Predicated region
    $region58: #{tpu_custom_call.1} parent=1 // pred_check
      _
    $region59: #{tpu_custom_call.1} parent=1 // pred_check_branch
      %145 = sbr.rel (0) target = $region61
    $region60: #{tpu_custom_call.1} parent=1 // pred_region
      %147 = dma.done [#allocation6], 1024
    $region61: #{tpu_custom_call.1} parent=1 // pred_fallthru
      _
    // Predicated region
    $region62: #{tpu_custom_call.1} parent=1 // pred_check
      _
    $region63: #{tpu_custom_call.1} parent=1 // pred_check_branch
      %149 = sbr.rel (0) target = $region65
    $region64: #{tpu_custom_call.1} parent=1 // pred_region
      %151 = dma.done [#allocation6], 1024
    $region65: #{tpu_custom_call.1} parent=1 // pred_fallthru
      _
    // Predicated region
    $region66: #{tpu_custom_call.1} parent=1 // pred_check
      _
    $region67: #{tpu_custom_call.1} parent=1 // pred_check_branch
      %153 = sbr.rel (0) target = $region69
    $region68: #{tpu_custom_call.1} parent=1 // pred_region
      %155 = dma.done [#allocation9], 1024
    $region69: #{tpu_custom_call.1} parent=1 // pred_fallthru
      _
    // Predicated region
    $region70: #{tpu_custom_call.1} parent=1 // pred_check
      _
    $region71: #{tpu_custom_call.1} parent=1 // pred_check_branch
      %157 = sbr.rel (0) target = $region73
    $region72: #{tpu_custom_call.1} parent=1 // pred_region
      %159 = dma.done [#allocation9], 1024
    $region73: #{tpu_custom_call.1} parent=1 // pred_fallthru
      _
    // Predicated region
    $region74: #{tpu_custom_call.1} parent=1 // pred_check
      _
    $region75: #{tpu_custom_call.1} parent=1 // pred_check_branch
      %161 = sbr.rel (0) target = $region77
    $region76: #{tpu_custom_call.1} parent=1 // pred_region
      %163 = dma.done [#allocation12], 3072
    $region77: #{tpu_custom_call.1} parent=1 // pred_fallthru
      _
    // Predicated region
    $region78: #{tpu_custom_call.1} parent=1 // pred_check
      _
    $region79: #{tpu_custom_call.1} parent=1 // pred_check_branch
      %165 = sbr.rel (0) target = $region81
    $region80: #{tpu_custom_call.1} parent=1 // pred_region
      %167 = dma.done [#allocation12], 3072
    $region81: #{tpu_custom_call.1} parent=1 // pred_fallthru
      _
    // Predicated region
    $region82: #{tpu_custom_call.1} parent=1 // pred_check
      _
    $region83: #{tpu_custom_call.1} parent=1 // pred_check_branch
      %169 = sbr.rel (0) target = $region85
    $region84: #{tpu_custom_call.1} parent=1 // pred_region
      %171 = dma.done [#allocation15], 3072
    $region85: #{tpu_custom_call.1} parent=1 // pred_fallthru
      _
    %s172 = smul.u32 0, 8
    %v173 = vlaneseq
    %v174 = vshrl.u32 %v173, 7
    %v175 = vstv %s172
    %v176 = vadd.s32 %v175, %v174
    %vm177 = vcmp.lt.s32.totalorder %v176, 8
    %v178 = vsel %vm177, 1, 0
    %v179 = vcvt.s32.f32 %v178
    %v180 = vld [vmem:[#allocation2] sm:$0xf]
    %v181 = vld [vmem:[#allocation5] sm:$0xf]
    %v182 = vld [vmem:[#allocation5 + $0x4] sm:$0xf]
    %v183 = vld [vmem:[#allocation5 + $0x8] sm:$0xf]
    %v184 = vld [vmem:[#allocation5 + $0xc] sm:$0xf]
    %v185 = vld [vmem:[#allocation5 + $0x10] sm:$0xf]
    %v186 = vld [vmem:[#allocation5 + $0x14] sm:$0xf]
    %v187 = vld [vmem:[#allocation5 + $0x18] sm:$0xf]
    %v188 = vld [vmem:[#allocation5 + $0x1c] sm:$0xf]
    %v189 = vld [vmem:[#allocation5 + $0x20] sm:$0xf]
    %v190 = vld [vmem:[#allocation5 + $0x24] sm:$0xf]
    %v191 = vld [vmem:[#allocation5 + $0x28] sm:$0xf]
    %v192 = vld [vmem:[#allocation5 + $0x2c] sm:$0xf]
    %v193 = vld [vmem:[#allocation5 + $0x30] sm:$0xf]
    %v194 = vld [vmem:[#allocation5 + $0x34] sm:$0xf]
    %v195 = vld [vmem:[#allocation5 + $0x38] sm:$0xf]
    %v196 = vld [vmem:[#allocation5 + $0x3c] sm:$0xf]
    %v197 = vld [vmem:[%s3] sm:$0x1]
    %v199 = vperm.slane %v197, 0
    %v217 = vunpack.c.l.b16 %v181
    %v218 = vunpack.c.l.b16 %v182
    %v219 = vunpack.c.l.b16 %v183
    %v220 = vunpack.c.l.b16 %v184
    %v221 = vunpack.c.l.b16 %v185
    %v222 = vunpack.c.l.b16 %v186
    %v223 = vunpack.c.l.b16 %v187
    %v224 = vunpack.c.l.b16 %v188
    %v225 = vunpack.c.l.b16 %v189
    %v226 = vunpack.c.l.b16 %v190
    %v227 = vunpack.c.l.b16 %v191
    %v228 = vunpack.c.l.b16 %v192
    %v229 = vunpack.c.l.b16 %v193
    %v230 = vunpack.c.l.b16 %v194
    %v231 = vunpack.c.l.b16 %v195
    %v232 = vunpack.c.l.b16 %v196
    %v233 = vpack.c.b16 %v218, %v217
    %v234 = vpack.c.b16 %v220, %v219
    %v235 = vpack.c.b16 %v222, %v221
    %v236 = vpack.c.b16 %v224, %v223
    %v237 = vpack.c.b16 %v226, %v225
    %v238 = vpack.c.b16 %v228, %v227
    %v239 = vpack.c.b16 %v230, %v229
    %v240 = vpack.c.b16 %v232, %v231
    %249 = vmatpush.bf16.msra.mxu0 %v240
    %250 = vmatpush.bf16.msra.mxu0 %v239
    %251 = vmatpush.bf16.msra.mxu0 %v238
    %252 = vmatpush.bf16.msra.mxu0 %v237
    %253 = vmatpush.bf16.msra.mxu0 %v236
    %254 = vmatpush.bf16.msra.mxu0 %v235
    %255 = vmatpush.bf16.msra.mxu0 %v234
    %256 = vmatpush.bf16.msra.mxu0 %v233
    %257 = vmatmul.bf16.gmra.mxu0 %v180
    %v258 = vpop.f32.mrf.mxu0
    %v259 = vadd.f32 %v199, %v258
    %v260 = vpop.f32.mrf.mxu0
    %261 = vdwg.mxu0
    %v262 = vmax.f32 %v259, 0.0
    %v263 = vpack.c.bf16 %v262, %v262
    %v264 = vld [vmem:[#allocation7] sm:$0xf]
    %v265 = vld [vmem:[#allocation7 + $0x4] sm:$0xf]
    %v266 = vld [vmem:[#allocation7 + $0x8] sm:$0xf]
    %v267 = vld [vmem:[#allocation7 + $0xc] sm:$0xf]
    %v268 = vld [vmem:[#allocation7 + $0x10] sm:$0xf]
    %v269 = vld [vmem:[#allocation7 + $0x14] sm:$0xf]
    %v270 = vld [vmem:[#allocation7 + $0x18] sm:$0xf]
    %v271 = vld [vmem:[#allocation7 + $0x1c] sm:$0xf]
    %v272 = vld [vmem:[#allocation7 + $0x20] sm:$0xf]
    %v273 = vld [vmem:[#allocation7 + $0x24] sm:$0xf]
    %v274 = vld [vmem:[#allocation7 + $0x28] sm:$0xf]
    %v275 = vld [vmem:[#allocation7 + $0x2c] sm:$0xf]
    %v276 = vld [vmem:[#allocation7 + $0x30] sm:$0xf]
    %v277 = vld [vmem:[#allocation7 + $0x34] sm:$0xf]
    %v278 = vld [vmem:[#allocation7 + $0x38] sm:$0xf]
    %v279 = vld [vmem:[#allocation7 + $0x3c] sm:$0xf]
    %v280 = vld [vmem:[%s4] sm:$0x1]
    %v282 = vperm.slane %v280, 0
    %v300 = vunpack.c.l.b16 %v264
    %v301 = vunpack.c.l.b16 %v265
    %v302 = vunpack.c.l.b16 %v266
    %v303 = vunpack.c.l.b16 %v267
    %v304 = vunpack.c.l.b16 %v268
    %v305 = vunpack.c.l.b16 %v269
    %v306 = vunpack.c.l.b16 %v270
    %v307 = vunpack.c.l.b16 %v271
    %v308 = vunpack.c.l.b16 %v272
    %v309 = vunpack.c.l.b16 %v273
    %v310 = vunpack.c.l.b16 %v274
    %v311 = vunpack.c.l.b16 %v275
    %v312 = vunpack.c.l.b16 %v276
    %v313 = vunpack.c.l.b16 %v277
    %v314 = vunpack.c.l.b16 %v278
    %v315 = vunpack.c.l.b16 %v279
    %v316 = vpack.c.b16 %v301, %v300
    %v317 = vpack.c.b16 %v303, %v302
    %v318 = vpack.c.b16 %v305, %v304
    %v319 = vpack.c.b16 %v307, %v306
    %v320 = vpack.c.b16 %v309, %v308
    %v321 = vpack.c.b16 %v311, %v310
    %v322 = vpack.c.b16 %v313, %v312
    %v323 = vpack.c.b16 %v315, %v314
    %332 = vmatpush.bf16.msra.mxu0 %v323
    %333 = vmatpush.bf16.msra.mxu0 %v322
    %334 = vmatpush.bf16.msra.mxu0 %v321
    %335 = vmatpush.bf16.msra.mxu0 %v320
    %336 = vmatpush.bf16.msra.mxu0 %v319
    %337 = vmatpush.bf16.msra.mxu0 %v318
    %338 = vmatpush.bf16.msra.mxu0 %v317
    %339 = vmatpush.bf16.msra.mxu0 %v316
    %340 = vmatmul.bf16.gmra.mxu0 %v263
    %v341 = vpop.f32.mrf.mxu0
    %v342 = vadd.f32 %v282, %v341
    %v343 = vpop.f32.mrf.mxu0
    %344 = vdwg.mxu0
    %v345 = vlaneseq
    %v346 = vand.u32 %v345, 127
    %v347 = vld [vmem:[#allocation11] sm:$0xf]
    %v348 = vld [vmem:[#allocation11 + $0x4] sm:$0xf]
    %v349 = vld [vmem:[#allocation11 + $0x8] sm:$0xf]
    %v350 = vld [vmem:[#allocation11 + $0xc] sm:$0xf]
    %v351 = vld [vmem:[#allocation11 + $0x10] sm:$0xf]
    %v352 = vld [vmem:[#allocation11 + $0x14] sm:$0xf]
    %v353 = vld [vmem:[#allocation11 + $0x18] sm:$0xf]
    %v354 = vld [vmem:[#allocation11 + $0x1c] sm:$0xf]
    %v355 = vld [vmem:[#allocation11 + $0x20] sm:$0xf]
    %v356 = vld [vmem:[#allocation11 + $0x24] sm:$0xf]
    %v357 = vld [vmem:[#allocation11 + $0x28] sm:$0xf]
    %v358 = vld [vmem:[#allocation11 + $0x2c] sm:$0xf]
    %v359 = vld [vmem:[#allocation11 + $0x30] sm:$0xf]
    %v360 = vld [vmem:[#allocation11 + $0x34] sm:$0xf]
    %v361 = vld [vmem:[#allocation11 + $0x38] sm:$0xf]
    %v362 = vld [vmem:[#allocation11 + $0x3c] sm:$0xf]
    %v363 = vld [vmem:[%s12] sm:$0x1]
    %v364 = vpack.c.bf16 %v342, %v342
    %v381 = vunpack.c.l.b16 %v347
    %v382 = vunpack.c.l.b16 %v348
    %v383 = vunpack.c.l.b16 %v349
    %v384 = vunpack.c.l.b16 %v350
    %v385 = vunpack.c.l.b16 %v351
    %v386 = vunpack.c.l.b16 %v352
    %v387 = vunpack.c.l.b16 %v353
    %v388 = vunpack.c.l.b16 %v354
    %v389 = vunpack.c.l.b16 %v355
    %v390 = vunpack.c.l.b16 %v356
    %v391 = vunpack.c.l.b16 %v357
    %v392 = vunpack.c.l.b16 %v358
    %v393 = vunpack.c.l.b16 %v359
    %v394 = vunpack.c.l.b16 %v360
    %v395 = vunpack.c.l.b16 %v361
    %v396 = vunpack.c.l.b16 %v362
    %v397 = vpack.c.b16 %v382, %v381
    %v398 = vpack.c.b16 %v384, %v383
    %v399 = vpack.c.b16 %v386, %v385
    %v400 = vpack.c.b16 %v388, %v387
    %v401 = vpack.c.b16 %v390, %v389
    %v402 = vpack.c.b16 %v392, %v391
    %v403 = vpack.c.b16 %v394, %v393
    %v404 = vpack.c.b16 %v396, %v395
    %413 = vmatpush.bf16.msra.mxu0 %v404
    %414 = vmatpush.bf16.msra.mxu0 %v403
    %415 = vmatpush.bf16.msra.mxu0 %v402
    %416 = vmatpush.bf16.msra.mxu0 %v401
    %417 = vmatpush.bf16.msra.mxu0 %v400
    %418 = vmatpush.bf16.msra.mxu0 %v399
    %419 = vmatpush.bf16.msra.mxu0 %v398
    %420 = vmatpush.bf16.msra.mxu0 %v397
    %421 = vmatmul.bf16.gmra.mxu0 %v364
    %v422 = vpop.f32.mrf.mxu0
    %v423 = vadd.f32 0.0, %v422
    %v424 = vpop.f32.mrf.mxu0
    %425 = vdwg.mxu0
    %v426 = vmul.f32 %v423, 2.0
    %v428 = vperm.slane %v363, 0
    %v430 = vsub.f32 %v428, %v426
    %431 = vmin.xlane.f32.xlu0 %v430
    %v432 = vpop.xlane.xlu0 %431
    %vm433 = vcmp.eq.f32.partialorder %v430, %v432
    %v434 = vsel %vm433, %v346, 128
    %v435 = vand.u32 %v434, 65535
    %v436 = vshra.s32 %v434, 16
    %v437 = vcvt.s32.f32 %v435
    %v438 = vcvt.s32.f32 %v436
    %439 = vmin.xlane.f32.xlu0 %v438
    %v440 = vpop.xlane.xlu0 %439
    %vm441 = vcmp.eq.f32.partialorder %v438, %v440
    %v442 = vsel %vm441, %v437, inf
    %443 = vmin.xlane.f32.xlu0 %v442
    %v444 = vpop.xlane.xlu0 %443
    %v445 = vcvt.f32.s32 %v444
    %v446 = vcvt.f32.s32 %v440
    %v447 = vshll.u32 %v446, 16
    %v448 = vadd.s32 %v447, %v445
    %vm449 = vcmp.eq.s32.totalorder %v346, %v448
    %v450 = vsel %vm449, 1, 0
    %v451 = vcvt.s32.f32 %v450
    %v452 = vpack.c.bf16 %v451, %v451
    %v453 = vld [vmem:[#allocation13] sm:$0xf]
    %v454 = vld [vmem:[#allocation13 + $0x4] sm:$0xf]
    %v455 = vld [vmem:[#allocation13 + $0x8] sm:$0xf]
    %v456 = vld [vmem:[#allocation13 + $0xc] sm:$0xf]
    %v457 = vld [vmem:[#allocation13 + $0x10] sm:$0xf]
    %v458 = vld [vmem:[#allocation13 + $0x14] sm:$0xf]
    %v459 = vld [vmem:[#allocation13 + $0x18] sm:$0xf]
    %v460 = vld [vmem:[#allocation13 + $0x1c] sm:$0xf]
    %v461 = vld [vmem:[#allocation13 + $0x20] sm:$0xf]
    %v462 = vld [vmem:[#allocation13 + $0x24] sm:$0xf]
    %v463 = vld [vmem:[#allocation13 + $0x28] sm:$0xf]
    %v464 = vld [vmem:[#allocation13 + $0x2c] sm:$0xf]
    %v465 = vld [vmem:[#allocation13 + $0x30] sm:$0xf]
    %v466 = vld [vmem:[#allocation13 + $0x34] sm:$0xf]
    %v467 = vld [vmem:[#allocation13 + $0x38] sm:$0xf]
    %v468 = vld [vmem:[#allocation13 + $0x3c] sm:$0xf]
    %v469 = vld [vmem:[#allocation14] sm:$0xf]
    %v470 = vld [vmem:[#allocation14 + $0x4] sm:$0xf]
    %v471 = vld [vmem:[#allocation14 + $0x8] sm:$0xf]
    %v472 = vld [vmem:[#allocation14 + $0xc] sm:$0xf]
    %v473 = vld [vmem:[#allocation14 + $0x10] sm:$0xf]
    %v474 = vld [vmem:[#allocation14 + $0x14] sm:$0xf]
    %v475 = vld [vmem:[#allocation14 + $0x18] sm:$0xf]
    %v476 = vld [vmem:[#allocation14 + $0x1c] sm:$0xf]
    %v477 = vld [vmem:[#allocation14 + $0x20] sm:$0xf]
    %v478 = vld [vmem:[#allocation14 + $0x24] sm:$0xf]
    %v479 = vld [vmem:[#allocation14 + $0x28] sm:$0xf]
    %v480 = vld [vmem:[#allocation14 + $0x2c] sm:$0xf]
    %v481 = vld [vmem:[#allocation14 + $0x30] sm:$0xf]
    %v482 = vld [vmem:[#allocation14 + $0x34] sm:$0xf]
    %v483 = vld [vmem:[#allocation14 + $0x38] sm:$0xf]
    %v484 = vld [vmem:[#allocation14 + $0x3c] sm:$0xf]
    %v501 = vunpack.c.l.b16 %v469
    %v502 = vunpack.c.l.b16 %v470
    %v503 = vunpack.c.l.b16 %v471
    %v504 = vunpack.c.l.b16 %v472
    %v505 = vunpack.c.l.b16 %v473
    %v506 = vunpack.c.l.b16 %v474
    %v507 = vunpack.c.l.b16 %v475
    %v508 = vunpack.c.l.b16 %v476
    %v509 = vunpack.c.l.b16 %v477
    %v510 = vunpack.c.l.b16 %v478
    %v511 = vunpack.c.l.b16 %v479
    %v512 = vunpack.c.l.b16 %v480
    %v513 = vunpack.c.l.b16 %v481
    %v514 = vunpack.c.l.b16 %v482
    %v515 = vunpack.c.l.b16 %v483
    %v516 = vunpack.c.l.b16 %v484
    %v517 = vpack.c.b16 %v502, %v501
    %v518 = vpack.c.b16 %v504, %v503
    %v519 = vpack.c.b16 %v506, %v505
    %v520 = vpack.c.b16 %v508, %v507
    %v521 = vpack.c.b16 %v510, %v509
    %v522 = vpack.c.b16 %v512, %v511
    %v523 = vpack.c.b16 %v514, %v513
    %v524 = vpack.c.b16 %v516, %v515
    %533 = vmatpush.bf16.msra.mxu0 %v524
    %534 = vmatpush.bf16.msra.mxu0 %v523
    %535 = vmatpush.bf16.msra.mxu0 %v522
    %536 = vmatpush.bf16.msra.mxu0 %v521
    %537 = vmatpush.bf16.msra.mxu0 %v520
    %538 = vmatpush.bf16.msra.mxu0 %v519
    %539 = vmatpush.bf16.msra.mxu0 %v518
    %540 = vmatpush.bf16.msra.mxu0 %v517
    %541 = vmatmul.bf16.gmra.mxu0 %v452
    %v542 = vpop.f32.mrf.mxu0
    %v543 = vadd.f32 0.0, %v542
    %v544 = vpop.f32.mrf.mxu0
    %545 = vdwg.mxu0
    %v562 = vunpack.c.l.b16 %v453
    %v563 = vunpack.c.l.b16 %v454
    %v564 = vunpack.c.l.b16 %v455
    %v565 = vunpack.c.l.b16 %v456
    %v566 = vunpack.c.l.b16 %v457
    %v567 = vunpack.c.l.b16 %v458
    %v568 = vunpack.c.l.b16 %v459
    %v569 = vunpack.c.l.b16 %v460
    %v570 = vunpack.c.l.b16 %v461
    %v571 = vunpack.c.l.b16 %v462
    %v572 = vunpack.c.l.b16 %v463
    %v573 = vunpack.c.l.b16 %v464
    %v574 = vunpack.c.l.b16 %v465
    %v575 = vunpack.c.l.b16 %v466
    %v576 = vunpack.c.l.b16 %v467
    %v577 = vunpack.c.l.b16 %v468
    %v578 = vpack.c.b16 %v563, %v562
    %v579 = vpack.c.b16 %v565, %v564
    %v580 = vpack.c.b16 %v567, %v566
    %v581 = vpack.c.b16 %v569, %v568
    %v582 = vpack.c.b16 %v571, %v570
    %v583 = vpack.c.b16 %v573, %v572
    %v584 = vpack.c.b16 %v575, %v574
    %v585 = vpack.c.b16 %v577, %v576
    %594 = vmatpush.bf16.msra.mxu0 %v585
    %595 = vmatpush.bf16.msra.mxu0 %v584
    %596 = vmatpush.bf16.msra.mxu0 %v583
    %597 = vmatpush.bf16.msra.mxu0 %v582
    %598 = vmatpush.bf16.msra.mxu0 %v581
    %599 = vmatpush.bf16.msra.mxu0 %v580
    %600 = vmatpush.bf16.msra.mxu0 %v579
    %601 = vmatpush.bf16.msra.mxu0 %v578
    %602 = vmatmul.bf16.gmra.mxu0 %v452
    %v603 = vpop.f32.mrf.mxu0
    %v604 = vadd.f32 %v543, %v603
    %v605 = vpop.f32.mrf.mxu0
    %606 = vdwg.mxu0
    %v607 = vsub.f32 %v342, %v604
    %v608 = vmul.f32 %v607, %v179
    %v609 = vmul.f32 %v608, %v608
    %610 = vadd.xlane.f32.xlu0 %v609
    %v611 = vpop.xlane.xlu0 %610
    %v612 = vrot.slane %v611, 4
    %v613 = vadd.f32 %v611, %v612
    %v614 = vrot.slane %v613, 2
    %v615 = vadd.f32 %v613, %v614
    %v616 = vrot.slane %v615, 1
    %v617 = vadd.f32 %v615, %v616
    %s618 = vtos %v617
    %v619 = vstv %s618
    %v620 = vadd.f32 %v619, 0.0
    %v621 = vadd.f32 %v604, 0.0
    %vm622 = vcmp.eq.s32.totalorder %v346, 0
    %v623 = vsel %vm622, %v448, 0
    %s624 = scalar_lea.vmem [#allocation11], 64
    %v625 = vld [vmem:[%s624] sm:$0xf]
    %v626 = vld [vmem:[%s624 + $0x4] sm:$0xf]
    %v627 = vld [vmem:[%s624 + $0x8] sm:$0xf]
    %v628 = vld [vmem:[%s624 + $0xc] sm:$0xf]
    %v629 = vld [vmem:[%s624 + $0x10] sm:$0xf]
    %v630 = vld [vmem:[%s624 + $0x14] sm:$0xf]
    %v631 = vld [vmem:[%s624 + $0x18] sm:$0xf]
    %v632 = vld [vmem:[%s624 + $0x1c] sm:$0xf]
    %v633 = vld [vmem:[%s624 + $0x20] sm:$0xf]
    %v634 = vld [vmem:[%s624 + $0x24] sm:$0xf]
    %v635 = vld [vmem:[%s624 + $0x28] sm:$0xf]
    %v636 = vld [vmem:[%s624 + $0x2c] sm:$0xf]
    %v637 = vld [vmem:[%s624 + $0x30] sm:$0xf]
    %v638 = vld [vmem:[%s624 + $0x34] sm:$0xf]
    %v639 = vld [vmem:[%s624 + $0x38] sm:$0xf]
    %v640 = vld [vmem:[%s624 + $0x3c] sm:$0xf]
    %s641 = scalar_lea.vmem %s12, 1
    %v642 = vld [vmem:[%s641] sm:$0x1]
    %v643 = vpack.c.bf16 %v607, %v607
    %v660 = vunpack.c.l.b16 %v625
    %v661 = vunpack.c.l.b16 %v626
    %v662 = vunpack.c.l.b16 %v627
    %v663 = vunpack.c.l.b16 %v628
    %v664 = vunpack.c.l.b16 %v629
    %v665 = vunpack.c.l.b16 %v630
    %v666 = vunpack.c.l.b16 %v631
    %v667 = vunpack.c.l.b16 %v632
    %v668 = vunpack.c.l.b16 %v633
    %v669 = vunpack.c.l.b16 %v634
    %v670 = vunpack.c.l.b16 %v635
    %v671 = vunpack.c.l.b16 %v636
    %v672 = vunpack.c.l.b16 %v637
    %v673 = vunpack.c.l.b16 %v638
    %v674 = vunpack.c.l.b16 %v639
    %v675 = vunpack.c.l.b16 %v640
    %v676 = vpack.c.b16 %v661, %v660
    %v677 = vpack.c.b16 %v663, %v662
    %v678 = vpack.c.b16 %v665, %v664
    %v679 = vpack.c.b16 %v667, %v666
    %v680 = vpack.c.b16 %v669, %v668
    %v681 = vpack.c.b16 %v671, %v670
    %v682 = vpack.c.b16 %v673, %v672
    %v683 = vpack.c.b16 %v675, %v674
    %692 = vmatpush.bf16.msra.mxu0 %v683
    %693 = vmatpush.bf16.msra.mxu0 %v682
    %694 = vmatpush.bf16.msra.mxu0 %v681
    %695 = vmatpush.bf16.msra.mxu0 %v680
    %696 = vmatpush.bf16.msra.mxu0 %v679
    %697 = vmatpush.bf16.msra.mxu0 %v678
    %698 = vmatpush.bf16.msra.mxu0 %v677
    %699 = vmatpush.bf16.msra.mxu0 %v676
    %700 = vmatmul.bf16.gmra.mxu0 %v643
    %v701 = vpop.f32.mrf.mxu0
    %v702 = vadd.f32 0.0, %v701
    %v703 = vpop.f32.mrf.mxu0
    %704 = vdwg.mxu0
    %v705 = vmul.f32 %v702, 2.0
    %v707 = vperm.slane %v642, 0
    %v709 = vsub.f32 %v707, %v705
    %710 = vmin.xlane.f32.xlu0 %v709
    %v711 = vpop.xlane.xlu0 %710
    %vm712 = vcmp.eq.f32.partialorder %v709, %v711
    %v713 = vsel %vm712, %v346, 128
    %v714 = vand.u32 %v713, 65535
    %v715 = vshra.s32 %v713, 16
    %v716 = vcvt.s32.f32 %v714
    %v717 = vcvt.s32.f32 %v715
    %718 = vmin.xlane.f32.xlu0 %v717
    %v719 = vpop.xlane.xlu0 %718
    %vm720 = vcmp.eq.f32.partialorder %v717, %v719
    %v721 = vsel %vm720, %v716, inf
    %722 = vmin.xlane.f32.xlu0 %v721
    %v723 = vpop.xlane.xlu0 %722
    %v724 = vcvt.f32.s32 %v723
    %v725 = vcvt.f32.s32 %v719
    %v726 = vshll.u32 %v725, 16
    %v727 = vadd.s32 %v726, %v724
    %vm728 = vcmp.eq.s32.totalorder %v346, %v727
    %v729 = vsel %vm728, 1, 0
    %v730 = vcvt.s32.f32 %v729
    %v731 = vpack.c.bf16 %v730, %v730
    %s732 = scalar_lea.vmem [#allocation13], 64
    %v733 = vld [vmem:[%s732] sm:$0xf]
    %v734 = vld [vmem:[%s732 + $0x4] sm:$0xf]
    %v735 = vld [vmem:[%s732 + $0x8] sm:$0xf]
    %v736 = vld [vmem:[%s732 + $0xc] sm:$0xf]
    %v737 = vld [vmem:[%s732 + $0x10] sm:$0xf]
    %v738 = vld [vmem:[%s732 + $0x14] sm:$0xf]
    %v739 = vld [vmem:[%s732 + $0x18] sm:$0xf]
    %v740 = vld [vmem:[%s732 + $0x1c] sm:$0xf]
    %v741 = vld [vmem:[%s732 + $0x20] sm:$0xf]
    %v742 = vld [vmem:[%s732 + $0x24] sm:$0xf]
    %v743 = vld [vmem:[%s732 + $0x28] sm:$0xf]
    %v744 = vld [vmem:[%s732 + $0x2c] sm:$0xf]
    %v745 = vld [vmem:[%s732 + $0x30] sm:$0xf]
    %v746 = vld [vmem:[%s732 + $0x34] sm:$0xf]
    %v747 = vld [vmem:[%s732 + $0x38] sm:$0xf]
    %v748 = vld [vmem:[%s732 + $0x3c] sm:$0xf]
    %s749 = scalar_lea.vmem [#allocation14], 64
    %v750 = vld [vmem:[%s749] sm:$0xf]
    %v751 = vld [vmem:[%s749 + $0x4] sm:$0xf]
    %v752 = vld [vmem:[%s749 + $0x8] sm:$0xf]
    %v753 = vld [vmem:[%s749 + $0xc] sm:$0xf]
    %v754 = vld [vmem:[%s749 + $0x10] sm:$0xf]
    %v755 = vld [vmem:[%s749 + $0x14] sm:$0xf]
    %v756 = vld [vmem:[%s749 + $0x18] sm:$0xf]
    %v757 = vld [vmem:[%s749 + $0x1c] sm:$0xf]
    %v758 = vld [vmem:[%s749 + $0x20] sm:$0xf]
    %v759 = vld [vmem:[%s749 + $0x24] sm:$0xf]
    %v760 = vld [vmem:[%s749 + $0x28] sm:$0xf]
    %v761 = vld [vmem:[%s749 + $0x2c] sm:$0xf]
    %v762 = vld [vmem:[%s749 + $0x30] sm:$0xf]
    %v763 = vld [vmem:[%s749 + $0x34] sm:$0xf]
    %v764 = vld [vmem:[%s749 + $0x38] sm:$0xf]
    %v765 = vld [vmem:[%s749 + $0x3c] sm:$0xf]
    %v782 = vunpack.c.l.b16 %v750
    %v783 = vunpack.c.l.b16 %v751
    %v784 = vunpack.c.l.b16 %v752
    %v785 = vunpack.c.l.b16 %v753
    %v786 = vunpack.c.l.b16 %v754
    %v787 = vunpack.c.l.b16 %v755
    %v788 = vunpack.c.l.b16 %v756
    %v789 = vunpack.c.l.b16 %v757
    %v790 = vunpack.c.l.b16 %v758
    %v791 = vunpack.c.l.b16 %v759
    %v792 = vunpack.c.l.b16 %v760
    %v793 = vunpack.c.l.b16 %v761
    %v794 = vunpack.c.l.b16 %v762
    %v795 = vunpack.c.l.b16 %v763
    %v796 = vunpack.c.l.b16 %v764
    %v797 = vunpack.c.l.b16 %v765
    %v798 = vpack.c.b16 %v783, %v782
    %v799 = vpack.c.b16 %v785, %v784
    %v800 = vpack.c.b16 %v787, %v786
    %v801 = vpack.c.b16 %v789, %v788
    %v802 = vpack.c.b16 %v791, %v790
    %v803 = vpack.c.b16 %v793, %v792
    %v804 = vpack.c.b16 %v795, %v794
    %v805 = vpack.c.b16 %v797, %v796
    %814 = vmatpush.bf16.msra.mxu0 %v805
    %815 = vmatpush.bf16.msra.mxu0 %v804
    %816 = vmatpush.bf16.msra.mxu0 %v803
    %817 = vmatpush.bf16.msra.mxu0 %v802
    %818 = vmatpush.bf16.msra.mxu0 %v801
    %819 = vmatpush.bf16.msra.mxu0 %v800
    %820 = vmatpush.bf16.msra.mxu0 %v799
    %821 = vmatpush.bf16.msra.mxu0 %v798
    %822 = vmatmul.bf16.gmra.mxu0 %v731
    %v823 = vpop.f32.mrf.mxu0
    %v824 = vadd.f32 0.0, %v823
    %v825 = vpop.f32.mrf.mxu0
    %826 = vdwg.mxu0
    %v843 = vunpack.c.l.b16 %v733
    %v844 = vunpack.c.l.b16 %v734
    %v845 = vunpack.c.l.b16 %v735
    %v846 = vunpack.c.l.b16 %v736
    %v847 = vunpack.c.l.b16 %v737
    %v848 = vunpack.c.l.b16 %v738
    %v849 = vunpack.c.l.b16 %v739
    %v850 = vunpack.c.l.b16 %v740
    %v851 = vunpack.c.l.b16 %v741
    %v852 = vunpack.c.l.b16 %v742
    %v853 = vunpack.c.l.b16 %v743
    %v854 = vunpack.c.l.b16 %v744
    %v855 = vunpack.c.l.b16 %v745
    %v856 = vunpack.c.l.b16 %v746
    %v857 = vunpack.c.l.b16 %v747
    %v858 = vunpack.c.l.b16 %v748
    %v859 = vpack.c.b16 %v844, %v843
    %v860 = vpack.c.b16 %v846, %v845
    %v861 = vpack.c.b16 %v848, %v847
    %v862 = vpack.c.b16 %v850, %v849
    %v863 = vpack.c.b16 %v852, %v851
    %v864 = vpack.c.b16 %v854, %v853
    %v865 = vpack.c.b16 %v856, %v855
    %v866 = vpack.c.b16 %v858, %v857
    %875 = vmatpush.bf16.msra.mxu0 %v866
    %876 = vmatpush.bf16.msra.mxu0 %v865
    %877 = vmatpush.bf16.msra.mxu0 %v864
    %878 = vmatpush.bf16.msra.mxu0 %v863
    %879 = vmatpush.bf16.msra.mxu0 %v862
    %880 = vmatpush.bf16.msra.mxu0 %v861
    %881 = vmatpush.bf16.msra.mxu0 %v860
    %882 = vmatpush.bf16.msra.mxu0 %v859
    %883 = vmatmul.bf16.gmra.mxu0 %v731
    %v884 = vpop.f32.mrf.mxu0
    %v885 = vadd.f32 %v824, %v884
    %v886 = vpop.f32.mrf.mxu0
    %887 = vdwg.mxu0
    %v888 = vsub.f32 %v607, %v885
    %v889 = vmul.f32 %v888, %v179
    %v890 = vmul.f32 %v889, %v889
    %891 = vadd.xlane.f32.xlu0 %v890
    %v892 = vpop.xlane.xlu0 %891
    %v893 = vrot.slane %v892, 4
    %v894 = vadd.f32 %v892, %v893
    %v895 = vrot.slane %v894, 2
    %v896 = vadd.f32 %v894, %v895
    %v897 = vrot.slane %v896, 1
    %v898 = vadd.f32 %v896, %v897
    %s899 = vtos %v898
    %v900 = vstv %s899
    %v901 = vadd.f32 %v620, %v900
    %v902 = vadd.f32 %v621, %v885
    %vm903 = vcmp.eq.s32.totalorder %v346, 1
    %v904 = vsel %vm903, %v727, %v623
    %s905 = scalar_lea.vmem [#allocation11], 128
    %v906 = vld [vmem:[%s905] sm:$0xf]
    %v907 = vld [vmem:[%s905 + $0x4] sm:$0xf]
    %v908 = vld [vmem:[%s905 + $0x8] sm:$0xf]
    %v909 = vld [vmem:[%s905 + $0xc] sm:$0xf]
    %v910 = vld [vmem:[%s905 + $0x10] sm:$0xf]
    %v911 = vld [vmem:[%s905 + $0x14] sm:$0xf]
    %v912 = vld [vmem:[%s905 + $0x18] sm:$0xf]
    %v913 = vld [vmem:[%s905 + $0x1c] sm:$0xf]
    %v914 = vld [vmem:[%s905 + $0x20] sm:$0xf]
    %v915 = vld [vmem:[%s905 + $0x24] sm:$0xf]
    %v916 = vld [vmem:[%s905 + $0x28] sm:$0xf]
    %v917 = vld [vmem:[%s905 + $0x2c] sm:$0xf]
    %v918 = vld [vmem:[%s905 + $0x30] sm:$0xf]
    %v919 = vld [vmem:[%s905 + $0x34] sm:$0xf]
    %v920 = vld [vmem:[%s905 + $0x38] sm:$0xf]
    %v921 = vld [vmem:[%s905 + $0x3c] sm:$0xf]
    %s922 = scalar_lea.vmem %s12, 2
    %v923 = vld [vmem:[%s922] sm:$0x1]
    %v924 = vpack.c.bf16 %v888, %v888
    %v941 = vunpack.c.l.b16 %v906
    %v942 = vunpack.c.l.b16 %v907
    %v943 = vunpack.c.l.b16 %v908
    %v944 = vunpack.c.l.b16 %v909
    %v945 = vunpack.c.l.b16 %v910
    %v946 = vunpack.c.l.b16 %v911
    %v947 = vunpack.c.l.b16 %v912
    %v948 = vunpack.c.l.b16 %v913
    %v949 = vunpack.c.l.b16 %v914
    %v950 = vunpack.c.l.b16 %v915
    %v951 = vunpack.c.l.b16 %v916
    %v952 = vunpack.c.l.b16 %v917
    %v953 = vunpack.c.l.b16 %v918
    %v954 = vunpack.c.l.b16 %v919
    %v955 = vunpack.c.l.b16 %v920
    %v956 = vunpack.c.l.b16 %v921
    %v957 = vpack.c.b16 %v942, %v941
    %v958 = vpack.c.b16 %v944, %v943
    %v959 = vpack.c.b16 %v946, %v945
    %v960 = vpack.c.b16 %v948, %v947
    %v961 = vpack.c.b16 %v950, %v949
    %v962 = vpack.c.b16 %v952, %v951
    %v963 = vpack.c.b16 %v954, %v953
    %v964 = vpack.c.b16 %v956, %v955
    %973 = vmatpush.bf16.msra.mxu0 %v964
    %974 = vmatpush.bf16.msra.mxu0 %v963
    %975 = vmatpush.bf16.msra.mxu0 %v962
    %976 = vmatpush.bf16.msra.mxu0 %v961
    %977 = vmatpush.bf16.msra.mxu0 %v960
    %978 = vmatpush.bf16.msra.mxu0 %v959
    %979 = vmatpush.bf16.msra.mxu0 %v958
    %980 = vmatpush.bf16.msra.mxu0 %v957
    %981 = vmatmul.bf16.gmra.mxu0 %v924
    %v982 = vpop.f32.mrf.mxu0
    %v983 = vadd.f32 0.0, %v982
    %v984 = vpop.f32.mrf.mxu0
    %985 = vdwg.mxu0
    %v986 = vmul.f32 %v983, 2.0
    %v988 = vperm.slane %v923, 0
    %v990 = vsub.f32 %v988, %v986
    %991 = vmin.xlane.f32.xlu0 %v990
    %v992 = vpop.xlane.xlu0 %991
    %vm993 = vcmp.eq.f32.partialorder %v990, %v992
    %v994 = vsel %vm993, %v346, 128
    %v995 = vand.u32 %v994, 65535
    %v996 = vshra.s32 %v994, 16
    %v997 = vcvt.s32.f32 %v995
    %v998 = vcvt.s32.f32 %v996
    %999 = vmin.xlane.f32.xlu0 %v998
    %v1000 = vpop.xlane.xlu0 %999
    %vm1001 = vcmp.eq.f32.partialorder %v998, %v1000
    %v1002 = vsel %vm1001, %v997, inf
    %1003 = vmin.xlane.f32.xlu0 %v1002
    %v1004 = vpop.xlane.xlu0 %1003
    %v1005 = vcvt.f32.s32 %v1004
    %v1006 = vcvt.f32.s32 %v1000
    %v1007 = vshll.u32 %v1006, 16
    %v1008 = vadd.s32 %v1007, %v1005
    %vm1009 = vcmp.eq.s32.totalorder %v346, %v1008
    %v1010 = vsel %vm1009, 1, 0
    %v1011 = vcvt.s32.f32 %v1010
    %v1012 = vpack.c.bf16 %v1011, %v1011
    %s1013 = scalar_lea.vmem [#allocation13], 128
    %v1014 = vld [vmem:[%s1013] sm:$0xf]
    %v1015 = vld [vmem:[%s1013 + $0x4] sm:$0xf]
    %v1016 = vld [vmem:[%s1013 + $0x8] sm:$0xf]
    %v1017 = vld [vmem:[%s1013 + $0xc] sm:$0xf]
    %v1018 = vld [vmem:[%s1013 + $0x10] sm:$0xf]
    %v1019 = vld [vmem:[%s1013 + $0x14] sm:$0xf]
    %v1020 = vld [vmem:[%s1013 + $0x18] sm:$0xf]
    %v1021 = vld [vmem:[%s1013 + $0x1c] sm:$0xf]
    %v1022 = vld [vmem:[%s1013 + $0x20] sm:$0xf]
    %v1023 = vld [vmem:[%s1013 + $0x24] sm:$0xf]
    %v1024 = vld [vmem:[%s1013 + $0x28] sm:$0xf]
    %v1025 = vld [vmem:[%s1013 + $0x2c] sm:$0xf]
    %v1026 = vld [vmem:[%s1013 + $0x30] sm:$0xf]
    %v1027 = vld [vmem:[%s1013 + $0x34] sm:$0xf]
    %v1028 = vld [vmem:[%s1013 + $0x38] sm:$0xf]
    %v1029 = vld [vmem:[%s1013 + $0x3c] sm:$0xf]
    %s1030 = scalar_lea.vmem [#allocation14], 128
    %v1031 = vld [vmem:[%s1030] sm:$0xf]
    %v1032 = vld [vmem:[%s1030 + $0x4] sm:$0xf]
    %v1033 = vld [vmem:[%s1030 + $0x8] sm:$0xf]
    %v1034 = vld [vmem:[%s1030 + $0xc] sm:$0xf]
    %v1035 = vld [vmem:[%s1030 + $0x10] sm:$0xf]
    %v1036 = vld [vmem:[%s1030 + $0x14] sm:$0xf]
    %v1037 = vld [vmem:[%s1030 + $0x18] sm:$0xf]
    %v1038 = vld [vmem:[%s1030 + $0x1c] sm:$0xf]
    %v1039 = vld [vmem:[%s1030 + $0x20] sm:$0xf]
    %v1040 = vld [vmem:[%s1030 + $0x24] sm:$0xf]
    %v1041 = vld [vmem:[%s1030 + $0x28] sm:$0xf]
    %v1042 = vld [vmem:[%s1030 + $0x2c] sm:$0xf]
    %v1043 = vld [vmem:[%s1030 + $0x30] sm:$0xf]
    %v1044 = vld [vmem:[%s1030 + $0x34] sm:$0xf]
    %v1045 = vld [vmem:[%s1030 + $0x38] sm:$0xf]
    %v1046 = vld [vmem:[%s1030 + $0x3c] sm:$0xf]
    %v1063 = vunpack.c.l.b16 %v1031
    %v1064 = vunpack.c.l.b16 %v1032
    %v1065 = vunpack.c.l.b16 %v1033
    %v1066 = vunpack.c.l.b16 %v1034
    %v1067 = vunpack.c.l.b16 %v1035
    %v1068 = vunpack.c.l.b16 %v1036
    %v1069 = vunpack.c.l.b16 %v1037
    %v1070 = vunpack.c.l.b16 %v1038
    %v1071 = vunpack.c.l.b16 %v1039
    %v1072 = vunpack.c.l.b16 %v1040
    %v1073 = vunpack.c.l.b16 %v1041
    %v1074 = vunpack.c.l.b16 %v1042
    %v1075 = vunpack.c.l.b16 %v1043
    %v1076 = vunpack.c.l.b16 %v1044
    %v1077 = vunpack.c.l.b16 %v1045
    %v1078 = vunpack.c.l.b16 %v1046
    %v1079 = vpack.c.b16 %v1064, %v1063
    %v1080 = vpack.c.b16 %v1066, %v1065
    %v1081 = vpack.c.b16 %v1068, %v1067
    %v1082 = vpack.c.b16 %v1070, %v1069
    %v1083 = vpack.c.b16 %v1072, %v1071
    %v1084 = vpack.c.b16 %v1074, %v1073
    %v1085 = vpack.c.b16 %v1076, %v1075
    %v1086 = vpack.c.b16 %v1078, %v1077
    %1095 = vmatpush.bf16.msra.mxu0 %v1086
    %1096 = vmatpush.bf16.msra.mxu0 %v1085
    %1097 = vmatpush.bf16.msra.mxu0 %v1084
    %1098 = vmatpush.bf16.msra.mxu0 %v1083
    %1099 = vmatpush.bf16.msra.mxu0 %v1082
    %1100 = vmatpush.bf16.msra.mxu0 %v1081
    %1101 = vmatpush.bf16.msra.mxu0 %v1080
    %1102 = vmatpush.bf16.msra.mxu0 %v1079
    %1103 = vmatmul.bf16.gmra.mxu0 %v1012
    %v1104 = vpop.f32.mrf.mxu0
    %v1105 = vadd.f32 0.0, %v1104
    %v1106 = vpop.f32.mrf.mxu0
    %1107 = vdwg.mxu0
    %v1124 = vunpack.c.l.b16 %v1014
    %v1125 = vunpack.c.l.b16 %v1015
    %v1126 = vunpack.c.l.b16 %v1016
    %v1127 = vunpack.c.l.b16 %v1017
    %v1128 = vunpack.c.l.b16 %v1018
    %v1129 = vunpack.c.l.b16 %v1019
    %v1130 = vunpack.c.l.b16 %v1020
    %v1131 = vunpack.c.l.b16 %v1021
    %v1132 = vunpack.c.l.b16 %v1022
    %v1133 = vunpack.c.l.b16 %v1023
    %v1134 = vunpack.c.l.b16 %v1024
    %v1135 = vunpack.c.l.b16 %v1025
    %v1136 = vunpack.c.l.b16 %v1026
    %v1137 = vunpack.c.l.b16 %v1027
    %v1138 = vunpack.c.l.b16 %v1028
    %v1139 = vunpack.c.l.b16 %v1029
    %v1140 = vpack.c.b16 %v1125, %v1124
    %v1141 = vpack.c.b16 %v1127, %v1126
    %v1142 = vpack.c.b16 %v1129, %v1128
    %v1143 = vpack.c.b16 %v1131, %v1130
    %v1144 = vpack.c.b16 %v1133, %v1132
    %v1145 = vpack.c.b16 %v1135, %v1134
    %v1146 = vpack.c.b16 %v1137, %v1136
    %v1147 = vpack.c.b16 %v1139, %v1138
    %1156 = vmatpush.bf16.msra.mxu0 %v1147
    %1157 = vmatpush.bf16.msra.mxu0 %v1146
    %1158 = vmatpush.bf16.msra.mxu0 %v1145
    %1159 = vmatpush.bf16.msra.mxu0 %v1144
    %1160 = vmatpush.bf16.msra.mxu0 %v1143
    %1161 = vmatpush.bf16.msra.mxu0 %v1142
    %1162 = vmatpush.bf16.msra.mxu0 %v1141
    %1163 = vmatpush.bf16.msra.mxu0 %v1140
    %1164 = vmatmul.bf16.gmra.mxu0 %v1012
    %v1165 = vpop.f32.mrf.mxu0
    %v1166 = vadd.f32 %v1105, %v1165
    %v1167 = vpop.f32.mrf.mxu0
    %1168 = vdwg.mxu0
    %v1169 = vsub.f32 %v888, %v1166
    %v1170 = vmul.f32 %v1169, %v179
    %v1171 = vmul.f32 %v1170, %v1170
    %1172 = vadd.xlane.f32.xlu0 %v1171
    %v1173 = vpop.xlane.xlu0 %1172
    %v1174 = vrot.slane %v1173, 4
    %v1175 = vadd.f32 %v1173, %v1174
    %v1176 = vrot.slane %v1175, 2
    %v1177 = vadd.f32 %v1175, %v1176
    %v1178 = vrot.slane %v1177, 1
    %v1179 = vadd.f32 %v1177, %v1178
    %s1180 = vtos %v1179
    %v1181 = vstv %s1180
    %v1182 = vadd.f32 %v901, %v1181
    %v1183 = vadd.f32 %v902, %v1166
    %vm1184 = vcmp.eq.s32.totalorder %v346, 2
    %v1185 = vsel %vm1184, %v1008, %v904
    %v1186 = vpack.c.bf16 %v1183, %v1183
    %v1187 = vld [vmem:[#allocation8] sm:$0xf]
    %v1188 = vld [vmem:[#allocation8 + $0x4] sm:$0xf]
    %v1189 = vld [vmem:[#allocation8 + $0x8] sm:$0xf]
    %v1190 = vld [vmem:[#allocation8 + $0xc] sm:$0xf]
    %v1191 = vld [vmem:[#allocation8 + $0x10] sm:$0xf]
    %v1192 = vld [vmem:[#allocation8 + $0x14] sm:$0xf]
    %v1193 = vld [vmem:[#allocation8 + $0x18] sm:$0xf]
    %v1194 = vld [vmem:[#allocation8 + $0x1c] sm:$0xf]
    %v1195 = vld [vmem:[#allocation8 + $0x20] sm:$0xf]
    %v1196 = vld [vmem:[#allocation8 + $0x24] sm:$0xf]
    %v1197 = vld [vmem:[#allocation8 + $0x28] sm:$0xf]
    %v1198 = vld [vmem:[#allocation8 + $0x2c] sm:$0xf]
    %v1199 = vld [vmem:[#allocation8 + $0x30] sm:$0xf]
    %v1200 = vld [vmem:[#allocation8 + $0x34] sm:$0xf]
    %v1201 = vld [vmem:[#allocation8 + $0x38] sm:$0xf]
    %v1202 = vld [vmem:[#allocation8 + $0x3c] sm:$0xf]
    %v1203 = vld [vmem:[%s7] sm:$0x1]
    %v1205 = vperm.slane %v1203, 0
    %v1223 = vunpack.c.l.b16 %v1187
    %v1224 = vunpack.c.l.b16 %v1188
    %v1225 = vunpack.c.l.b16 %v1189
    %v1226 = vunpack.c.l.b16 %v1190
    %v1227 = vunpack.c.l.b16 %v1191
    %v1228 = vunpack.c.l.b16 %v1192
    %v1229 = vunpack.c.l.b16 %v1193
    %v1230 = vunpack.c.l.b16 %v1194
    %v1231 = vunpack.c.l.b16 %v1195
    %v1232 = vunpack.c.l.b16 %v1196
    %v1233 = vunpack.c.l.b16 %v1197
    %v1234 = vunpack.c.l.b16 %v1198
    %v1235 = vunpack.c.l.b16 %v1199
    %v1236 = vunpack.c.l.b16 %v1200
    %v1237 = vunpack.c.l.b16 %v1201
    %v1238 = vunpack.c.l.b16 %v1202
    %v1239 = vpack.c.b16 %v1224, %v1223
    %v1240 = vpack.c.b16 %v1226, %v1225
    %v1241 = vpack.c.b16 %v1228, %v1227
    %v1242 = vpack.c.b16 %v1230, %v1229
    %v1243 = vpack.c.b16 %v1232, %v1231
    %v1244 = vpack.c.b16 %v1234, %v1233
    %v1245 = vpack.c.b16 %v1236, %v1235
    %v1246 = vpack.c.b16 %v1238, %v1237
    %1255 = vmatpush.bf16.msra.mxu0 %v1246
    %1256 = vmatpush.bf16.msra.mxu0 %v1245
    %1257 = vmatpush.bf16.msra.mxu0 %v1244
    %1258 = vmatpush.bf16.msra.mxu0 %v1243
    %1259 = vmatpush.bf16.msra.mxu0 %v1242
    %1260 = vmatpush.bf16.msra.mxu0 %v1241
    %1261 = vmatpush.bf16.msra.mxu0 %v1240
    %1262 = vmatpush.bf16.msra.mxu0 %v1239
    %1263 = vmatmul.bf16.gmra.mxu0 %v1186
    %v1264 = vpop.f32.mrf.mxu0
    %v1265 = vadd.f32 %v1205, %v1264
    %v1266 = vpop.f32.mrf.mxu0
    %1267 = vdwg.mxu0
    %v1268 = vmax.f32 %v1265, 0.0
    %v1269 = vpack.c.bf16 %v1268, %v1268
    %v1270 = vld [vmem:[#allocation10] sm:$0xf]
    %v1271 = vld [vmem:[#allocation10 + $0x4] sm:$0xf]
    %v1272 = vld [vmem:[#allocation10 + $0x8] sm:$0xf]
    %v1273 = vld [vmem:[#allocation10 + $0xc] sm:$0xf]
    %v1274 = vld [vmem:[#allocation10 + $0x10] sm:$0xf]
    %v1275 = vld [vmem:[#allocation10 + $0x14] sm:$0xf]
    %v1276 = vld [vmem:[#allocation10 + $0x18] sm:$0xf]
    %v1277 = vld [vmem:[#allocation10 + $0x1c] sm:$0xf]
    %v1278 = vld [vmem:[#allocation10 + $0x20] sm:$0xf]
    %v1279 = vld [vmem:[#allocation10 + $0x24] sm:$0xf]
    %v1280 = vld [vmem:[#allocation10 + $0x28] sm:$0xf]
    %v1281 = vld [vmem:[#allocation10 + $0x2c] sm:$0xf]
    %v1282 = vld [vmem:[#allocation10 + $0x30] sm:$0xf]
    %v1283 = vld [vmem:[#allocation10 + $0x34] sm:$0xf]
    %v1284 = vld [vmem:[#allocation10 + $0x38] sm:$0xf]
    %v1285 = vld [vmem:[#allocation10 + $0x3c] sm:$0xf]
    %v1286 = vld [vmem:[%s8] sm:$0x1]
    %v1288 = vperm.slane %v1286, 0
    %v1306 = vunpack.c.l.b16 %v1270
    %v1307 = vunpack.c.l.b16 %v1271
    %v1308 = vunpack.c.l.b16 %v1272
    %v1309 = vunpack.c.l.b16 %v1273
    %v1310 = vunpack.c.l.b16 %v1274
    %v1311 = vunpack.c.l.b16 %v1275
    %v1312 = vunpack.c.l.b16 %v1276
    %v1313 = vunpack.c.l.b16 %v1277
    %v1314 = vunpack.c.l.b16 %v1278
    %v1315 = vunpack.c.l.b16 %v1279
    %v1316 = vunpack.c.l.b16 %v1280
    %v1317 = vunpack.c.l.b16 %v1281
    %v1318 = vunpack.c.l.b16 %v1282
    %v1319 = vunpack.c.l.b16 %v1283
    %v1320 = vunpack.c.l.b16 %v1284
    %v1321 = vunpack.c.l.b16 %v1285
    %v1322 = vpack.c.b16 %v1307, %v1306
    %v1323 = vpack.c.b16 %v1309, %v1308
    %v1324 = vpack.c.b16 %v1311, %v1310
    %v1325 = vpack.c.b16 %v1313, %v1312
    %v1326 = vpack.c.b16 %v1315, %v1314
    %v1327 = vpack.c.b16 %v1317, %v1316
    %v1328 = vpack.c.b16 %v1319, %v1318
    %v1329 = vpack.c.b16 %v1321, %v1320
    %1338 = vmatpush.bf16.msra.mxu0 %v1329
    %1339 = vmatpush.bf16.msra.mxu0 %v1328
    %1340 = vmatpush.bf16.msra.mxu0 %v1327
    %1341 = vmatpush.bf16.msra.mxu0 %v1326
    %1342 = vmatpush.bf16.msra.mxu0 %v1325
    %1343 = vmatpush.bf16.msra.mxu0 %v1324
    %1344 = vmatpush.bf16.msra.mxu0 %v1323
    %1345 = vmatpush.bf16.msra.mxu0 %v1322
    %1346 = vmatmul.bf16.gmra.mxu0 %v1269
    %v1347 = vpop.f32.mrf.mxu0
    %v1348 = vadd.f32 %v1288, %v1347
    %v1349 = vpop.f32.mrf.mxu0
    %1350 = vdwg.mxu0
    %1351 = vst [vmem:[#allocation16] sm:$0xff] %v1348
    %1352 = vst [vmem:[#allocation17] sm:$0xff] %v1185
    %1353 = vst [vmem:[#allocation19] sm:$0xff] %v1182
    // Predicated region
    $region86: #{tpu_custom_call.1} parent=1 // pred_check
      _
    $region87: #{tpu_custom_call.1} parent=1 // pred_check_branch
      %1355 = sbr.rel (0) target = $region89
    $region88: #{tpu_custom_call.1} parent=1 // pred_region
      %1357 = vsyncadd [#allocation4], 0
      %s1359 = sshll.u32 [#allocation16], 4
      %s1360 = int_to_ptr.vmem [resolvable:$true] %s1359
      %s1361 = sshll.u32 %s13, 4
      %s1362 = int_to_ptr.hbm [resolvable:$true] %s1361
      %1364 = dma.vmem_to_hbm [thread:$0]  %s1360, 128, %s1362, [#allocation4]
    $region89: #{tpu_custom_call.1} parent=1 // pred_fallthru
      _
    // Predicated region
    $region90: #{tpu_custom_call.1} parent=1 // pred_check
      _
    $region91: #{tpu_custom_call.1} parent=1 // pred_check_branch
      %1366 = sbr.rel (0) target = $region93
    $region92: #{tpu_custom_call.1} parent=1 // pred_region
      %1368 = vsyncadd [#allocation18], 0
      %s1370 = sshll.u32 [#allocation17], 4
      %s1371 = int_to_ptr.vmem [resolvable:$true] %s1370
      %s1372 = sshll.u32 %s14, 4
      %s1373 = int_to_ptr.hbm [resolvable:$true] %s1372
      %1375 = dma.vmem_to_hbm [thread:$0]  %s1371, 128, %s1373, [#allocation18]
    $region93: #{tpu_custom_call.1} parent=1 // pred_fallthru
      _
    // Predicated region
    $region94: #{tpu_custom_call.1} parent=1 // pred_check
      _
    $region95: #{tpu_custom_call.1} parent=1 // pred_check_branch
      %1377 = sbr.rel (0) target = $region97
    $region96: #{tpu_custom_call.1} parent=1 // pred_region
      %1379 = vsyncadd [#allocation18], 0
      %s1381 = sshll.u32 [#allocation19], 4
      %s1382 = int_to_ptr.vmem [resolvable:$true] %s1381
      %s1383 = sshll.u32 %s15, 4
      %s1384 = int_to_ptr.hbm [resolvable:$true] %s1383
      %1386 = dma.vmem_to_hbm [thread:$0]  %s1382, 128, %s1384, [#allocation18]
    $region97: #{tpu_custom_call.1} parent=1 // pred_fallthru
      _
    // Predicated region
    $region98: #{tpu_custom_call.1} parent=1 // pred_check
      _
    $region99: #{tpu_custom_call.1} parent=1 // pred_check_branch
      %1388 = sbr.rel (0) target = $region101
    $region100: #{tpu_custom_call.1} parent=1 // pred_region
      %1390 = dma.done [#allocation4], 128
    $region101: #{tpu_custom_call.1} parent=1 // pred_fallthru
      _
    // Predicated region
    $region102: #{tpu_custom_call.1} parent=1 // pred_check
      _
    $region103: #{tpu_custom_call.1} parent=1 // pred_check_branch
      %1392 = sbr.rel (0) target = $region105
    $region104: #{tpu_custom_call.1} parent=1 // pred_region
      %1394 = dma.done [#allocation18], 128
    $region105: #{tpu_custom_call.1} parent=1 // pred_fallthru
      _
    // Predicated region
    $region106: #{tpu_custom_call.1} parent=1 // pred_check
      _
    $region107: #{tpu_custom_call.1} parent=1 // pred_check_branch
      %1396 = sbr.rel (0) target = $region109
    $region108: #{tpu_custom_call.1} parent=1 // pred_region
      %1398 = dma.done [#allocation18], 128
    $region109: #{tpu_custom_call.1} parent=1 // pred_fallthru
      _
    %1399 = vsyncpa [#allocation3], 1
    %1400 = vsyncpa [#allocation6], 1
    %1401 = vsyncpa [#allocation9], 1
    %1402 = vsyncpa [#allocation12], 1
    %1403 = vsyncpa [#allocation15], 1
    %1404 = vsyncpa [#allocation4], 1
    %1405 = vsyncpa [#allocation18], 1

</llo_original>
